<compile_context>
chip_gen: v7x
topology: tpu7x:2x2x1
jax: 0.10.0
libtpu: 0.0.40
codegen_flags: <defaults>
</compile_context>

<pallas_src>
import math
import functools

import jax
import jax.numpy as jnp
from jax import lax
from jax.experimental import pallas as pl
from jax.experimental.pallas import tpu as pltpu

_NEG = -1e30                      # additive mask for padded key columns (exp underflows to 0)
_LANE = 128
_VMEM_LIMIT = 64 * 1024 * 1024


def _round_up(x, m):
    return ((x + m - 1) // m) * m


def _const_spec(shape):
    """BlockSpec for an operand whose block never changes: single-buffered."""
    nd = len(shape)
    return pl.BlockSpec(shape, lambda *_: (0,) * nd,
                        pipeline_mode=pl.Buffered(buffer_count=1))


# ----------------------------------------------------------------------------
# Kernel 1: fused Q/K/V projection, batch folded into the matmul M dimension.
# ----------------------------------------------------------------------------
def _qkv_proj_kernel(x_ref, wq_ref, wk_ref, wv_ref, bq_ref, bv_ref,
                     q_ref, k_ref, v_ref):
    x = x_ref[...]                                                    # (TM, E) bf16
    q = jnp.dot(x, wq_ref[...], preferred_element_type=jnp.float32) + bq_ref[...]
    k = jnp.dot(x, wk_ref[...], preferred_element_type=jnp.float32)   # k_proj: no bias
    v = jnp.dot(x, wv_ref[...], preferred_element_type=jnp.float32) + bv_ref[...]
    q_ref[...] = q.astype(q_ref.dtype)
    k_ref[...] = k.astype(k_ref.dtype)
    v_ref[...] = v.astype(v_ref.dtype)


# ----------------------------------------------------------------------------
# Kernel 2: per-(batch, q-tile, head) attention with exact top-k sparse mask.
# ----------------------------------------------------------------------------
def _attn_kernel(q_ref, k_ref, v_ref, bias_ref, wo_ref, bo_ref,
                 out_ref, *attnw_refs,
                 scaling, kk, inv_heads, need_weights):
    h = pl.program_id(2)
    last_h = pl.num_programs(2) - 1

    @pl.when(h == 0)
    def _init():
        out_ref[...] = jnp.zeros_like(out_ref)
        if need_weights:
            attnw_refs[0][...] = jnp.zeros_like(attnw_refs[0])

    q = q_ref[0, 0]                                                   # (TQ, hd)  bf16
    k = k_ref[0, 0]                                                   # (S,  hd)  bf16
    v = v_ref[0, 0]                                                   # (S,  hd)  bf16

    # Scores: contract on head_dim directly (no K transpose on the XLU).
    s = lax.dot_general(q, k, dimension_numbers=(((1,), (1,)), ((), ())),
                        preferred_element_type=jnp.float32)           # (TQ, S)
    s = s * scaling + bias_ref[0, 0]

    # ---- exact top-k threshold, O(kk*S) per row ----------------------------
    # Walk distinct row values from the top, tracking how many entries are
    # >= the running threshold; stop once that count reaches kk.  Matches
    # torch.topk(...)[-1] semantics including ties; never builds (T,S,S).
    tq = s.shape[0]
    neg = jnp.float32(_NEG)

    def tk_body(_, carry):
        thr, cnt = carry
        cand = jnp.where(s < thr, s, neg)
        nxt = jnp.max(cand, axis=-1, keepdims=True)
        new_cnt = jnp.sum((s >= nxt).astype(jnp.float32), axis=-1, keepdims=True)
        done = cnt >= kk
        return (jnp.where(done, thr, nxt), jnp.where(done, cnt, new_cnt))

    thr, _ = lax.fori_loop(
        0, kk, tk_body,
        (jnp.full((tq, 1), jnp.inf, jnp.float32),
         jnp.zeros((tq, 1), jnp.float32)))
    s = jnp.where(s < thr, -jnp.inf, s)

    # ---- softmax (reciprocal on the EUP; guarded against fully-masked rows) ----
    m = jnp.maximum(jnp.max(s, axis=-1, keepdims=True), neg)
    p = jnp.exp(s - m)
    l = jnp.maximum(jnp.sum(p, axis=-1, keepdims=True), jnp.float32(1e-20))
    p = p * pl.reciprocal(l, approx=True)

    if need_weights:
        attnw_refs[0][0] += p * inv_heads                             # head-averaged weights

    # ---- attention * V, fused per-head slab of the output projection -------
    ah = jnp.dot(p.astype(jnp.bfloat16), v,
                 preferred_element_type=jnp.float32)                  # (TQ, hd)
    out_ref[0] += jnp.dot(ah.astype(jnp.bfloat16), wo_ref[0],
                          preferred_element_type=jnp.float32)         # (TQ, E)

    @pl.when(h == last_h)
    def _final():
        out_ref[0] += bo_ref[...]                                     # out_proj bias


# ----------------------------------------------------------------------------
# Wrapper
# ----------------------------------------------------------------------------
def deformable_mha_forward(query, attn_bias, params, *, num_heads, d_tilde=1,
                           topk=20, need_weights=True):
    """query: (tgt_len, bsz, embed_dim); attn_bias: (bsz, num_heads, tgt_len, tgt_len).

    Matches the PyTorch forward (self-attention, no key_padding_mask/attn_mask,
    need_head_weights=False):
      attn:         (tgt_len, bsz, embed_dim)           float32
      attn_weights: (bsz, tgt_len, src_len) or None     float32 (mean over heads)
    """
    T, B, E = query.shape
    H = num_heads
    hd = E // H
    assert hd * H == E, "embed_dim must be divisible by num_heads"
    S = T
    scaling = (hd / d_tilde) ** 0.5 / hd
    kk = min(topk, S)

    # Lane-dense padded sizes.
    E_pad = _round_up(E, _LANE)
    T_pad = _round_up(T, _LANE)
    S_pad = T_pad
    TQ = _LANE

    # ---- parameters: torch Linear weights are (out,in) -> (in,out), pad, bf16 ----
    def pad_w(w):                                  # (E,E) -> (E_pad,E_pad) bf16
        return jnp.pad(w.T, ((0, E_pad - E), (0, E_pad - E))).astype(jnp.bfloat16)

    def pad_b(b):                                  # (E,) -> (1,E_pad) f32
        return jnp.pad(b, (0, E_pad - E)).reshape(1, E_pad).astype(jnp.float32)

    wq, wk, wv = pad_w(params["q_w"]), pad_w(params["k_w"]), pad_w(params["v_w"])
    bq, bv = pad_b(params["q_b"]), pad_b(params["v_b"])
    # Output projection reshaped to per-head input slabs: (H, hd, E_pad).
    wo_heads = jnp.pad(params["o_w"].T, ((0, 0), (0, E_pad - E)))
    wo_heads = wo_heads.reshape(H, hd, E_pad).astype(jnp.bfloat16)
    bo = pad_b(params["o_b"])

    # ---- 1) fused Q/K/V projections over B*T rows --------------------------------
    x = jnp.transpose(query, (1, 0, 2)).reshape(B * T, E)
    TM = 256
    Mp = _round_up(B * T, TM)
    x = jnp.pad(x, ((0, Mp - B * T), (0, E_pad - E))).astype(jnp.bfloat16)

    row_spec = pl.BlockSpec((TM, E_pad), lambda m: (m, 0))
    q2, k2, v2 = pl.pallas_call(
        _qkv_proj_kernel,
        grid=(Mp // TM,),
        in_specs=[row_spec,
                  _const_spec((E_pad, E_pad)), _const_spec((E_pad, E_pad)),
                  _const_spec((E_pad, E_pad)),
                  _const_spec((1, E_pad)), _const_spec((1, E_pad))],
        out_specs=(row_spec, row_spec, row_spec),
        out_shape=tuple(jax.ShapeDtypeStruct((Mp, E_pad), jnp.bfloat16)
                        for _ in range(3)),
        compiler_params=pltpu.CompilerParams(
            dimension_semantics=("parallel",), vmem_limit_bytes=_VMEM_LIMIT),
    )(x, wq, wk, wv, bq, bv)

    # ---- head-major layout (B, H, T_pad, hd), bf16 --------------------------------
    def to_heads(z):
        z = z[:B * T, :E].reshape(B, T, H, hd)
        z = jnp.transpose(z, (0, 2, 1, 3))
        return jnp.pad(z, ((0, 0), (0, 0), (0, T_pad - T), (0, 0)))

    q_h, k_h, v_h = to_heads(q2), to_heads(k2), to_heads(v2)

    # attn_bias: padded key columns get a large negative additive mask; padded
    # query rows get 0 (their outputs are sliced away afterwards).
    bias_p = jnp.pad(attn_bias.astype(jnp.float32),
                     ((0, 0), (0, 0), (0, 0), (0, S_pad - S)),
                     constant_values=_NEG)
    bias_p = jnp.pad(bias_p, ((0, 0), (0, 0), (0, T_pad - T), (0, 0)))

    # ---- 2) attention -------------------------------------------------------------
    kernel = functools.partial(_attn_kernel, scaling=scaling, kk=kk,
                               inv_heads=1.0 / H, need_weights=need_weights)

    out_specs = [pl.BlockSpec((1, TQ, E_pad), lambda b, t, h: (b, t, 0))]
    out_shape = [jax.ShapeDtypeStruct((B, T_pad, E_pad), jnp.float32)]
    if need_weights:
        out_specs.append(pl.BlockSpec((1, TQ, S_pad), lambda b, t, h: (b, t, 0)))
        out_shape.append(jax.ShapeDtypeStruct((B, T_pad, S_pad), jnp.float32))

    res = pl.pallas_call(
        kernel,
        grid=(B, T_pad // TQ, H),
        in_specs=[
            pl.BlockSpec((1, 1, TQ, hd), lambda b, t, h: (b, h, t, 0)),     # q
            pl.BlockSpec((1, 1, S_pad, hd), lambda b, t, h: (b, h, 0, 0)),  # k
            pl.BlockSpec((1, 1, S_pad, hd), lambda b, t, h: (b, h, 0, 0)),  # v
            pl.BlockSpec((1, 1, TQ, S_pad), lambda b, t, h: (b, h, t, 0)),  # attn_bias
            pl.BlockSpec((1, hd, E_pad), lambda b, t, h: (h, 0, 0)),        # Wo head slab
            _const_spec((1, E_pad)),                                        # bo
        ],
        out_specs=tuple(out_specs),
        out_shape=tuple(out_shape),
        compiler_params=pltpu.CompilerParams(
            dimension_semantics=("parallel", "parallel", "arbitrary"),
            vmem_limit_bytes=_VMEM_LIMIT),
    )(q_h, k_h, v_h, bias_p, wo_heads, bo)

    if need_weights:
        out_p, attnw_p = res
        attn_weights = attnw_p[:, :T, :S]
    else:
        out_p = res[0] if isinstance(res, (tuple, list)) else res
        attn_weights = None

    attn = jnp.transpose(out_p[:, :T, :E], (1, 0, 2))                 # (T, B, E)
    return attn, attn_weights


def init_params(key, embed_dim, d_tilde=1):
    """Deterministic parameter init mirroring reset_parameters() shapes/gains."""
    def xavier_uniform(k, shape, gain):
        fan_out, fan_in = shape                                       # torch weight (out, in)
        a = gain * math.sqrt(6.0 / (fan_in + fan_out))
        return jax.random.uniform(k, shape, jnp.float32, -a, a)

    ks = jax.random.split(key, 7)
    g_qkv = 1.0 / math.sqrt(2 * d_tilde)
    g_out = 1.0 / math.sqrt(d_tilde)
    bound = 1.0 / math.sqrt(embed_dim)
    return {
        "k_w": xavier_uniform(ks[0], (embed_dim, embed_dim), g_qkv),
        "v_w": xavier_uniform(ks[1], (embed_dim, embed_dim), g_qkv),
        "q_w": xavier_uniform(ks[2], (embed_dim, embed_dim), g_qkv),
        "o_w": xavier_uniform(ks[3], (embed_dim, embed_dim), g_out),
        "q_b": jax.random.uniform(ks[4], (embed_dim,), jnp.float32, -bound, bound),
        "v_b": jax.random.uniform(ks[5], (embed_dim,), jnp.float32, -bound, bound),
        "o_b": jnp.zeros((embed_dim,), jnp.float32),                  # init.constant_(0.0)
    }


if __name__ == "__main__":
    # Small shapes: tgt_len=32 (> topk=20 so the sparse mask is active),
    # bsz=2, embed_dim=32, num_heads=4 (head_dim=8).
    tgt_len, bsz, embed_dim, num_heads = 32, 2, 32, 4

    key = jax.random.PRNGKey(0)
    k_param, k_query, k_bias = jax.random.split(key, 3)

    params = init_params(k_param, embed_dim)
    query = jax.random.normal(k_query, (tgt_len, bsz, embed_dim), jnp.float32)
    attn_bias = 0.1 * jax.random.normal(
        k_bias, (bsz, num_heads, tgt_len, tgt_len), jnp.float32)

    # TODO(synk): key_padding_mask / attn_mask / pbc_expand gather / RoPE branches
    # are not exercised (all None / disabled by default); only the core path is in-kernel.
    attn, attn_weights = deformable_mha_forward(
        query, attn_bias, params, num_heads=num_heads, topk=20, need_weights=True)

    attn = jax.block_until_ready(attn)
    attn_weights = jax.block_until_ready(attn_weights)

    assert attn.shape == (tgt_len, bsz, embed_dim)
    assert attn_weights.shape == (bsz, tgt_len, tgt_len)
    assert bool(jnp.all(jnp.isfinite(attn)))
    assert bool(jnp.all(jnp.isfinite(attn_weights)))
    print("KERNEL_OK")
</pallas_src>

<mosaic_0001>
module attributes {stable_mosaic.version = 11 : i64} {
  func.func @_qkv_proj_kernel(%arg0: i32, %arg1: memref<256x128xbf16, #tpu.memory_space<vmem>>, %arg2: memref<128x128xbf16, #tpu.memory_space<vmem>>, %arg3: memref<128x128xbf16, #tpu.memory_space<vmem>>, %arg4: memref<128x128xbf16, #tpu.memory_space<vmem>>, %arg5: memref<1x128xf32, #tpu.memory_space<vmem>>, %arg6: memref<1x128xf32, #tpu.memory_space<vmem>>, %arg7: memref<256x128xbf16, #tpu.memory_space<vmem>>, %arg8: memref<256x128xbf16, #tpu.memory_space<vmem>>, %arg9: memref<256x128xbf16, #tpu.memory_space<vmem>>) attributes {dimension_semantics = [#tpu.dimension_semantics<parallel>], iteration_bounds = array<i64: 1>, scalar_prefetch = 0 : i64, scratch_operands = 0 : i64, tpu.core_type = #tpu.core_type<tc>, window_params = [{transform_indices = @transform_0, window_bounds = array<i64: 256, 128>}, {pipeline_mode = #tpu.pipeline_mode<synchronous>, transform_indices = @transform_1, window_bounds = array<i64: 128, 128>}, {pipeline_mode = #tpu.pipeline_mode<synchronous>, transform_indices = @transform_2, window_bounds = array<i64: 128, 128>}, {pipeline_mode = #tpu.pipeline_mode<synchronous>, transform_indices = @transform_3, window_bounds = array<i64: 128, 128>}, {pipeline_mode = #tpu.pipeline_mode<synchronous>, transform_indices = @transform_4, window_bounds = array<i64: 1, 128>}, {pipeline_mode = #tpu.pipeline_mode<synchronous>, transform_indices = @transform_5, window_bounds = array<i64: 1, 128>}, {transform_indices = @transform_6, window_bounds = array<i64: 256, 128>}, {transform_indices = @transform_7, window_bounds = array<i64: 256, 128>}, {transform_indices = @transform_8, window_bounds = array<i64: 256, 128>}]} {
    %c0 = arith.constant 0 : index
    %c0_0 = arith.constant 0 : index
    %0 = vector.load %arg1[%c0, %c0_0] : memref<256x128xbf16, #tpu.memory_space<vmem>>, vector<256x128xbf16>
    %c0_1 = arith.constant 0 : index
    %c0_2 = arith.constant 0 : index
    %1 = vector.load %arg2[%c0_1, %c0_2] : memref<128x128xbf16, #tpu.memory_space<vmem>>, vector<128x128xbf16>
    %cst = arith.constant dense<0.000000e+00> : vector<256x128xf32>
    %2 = tpu.matmul %0, %1, %cst {dimension_numbers = #tpu.dot_dimension_numbers<[1], [0], [0], [1], [0, 0, 1, 1], [], []>} : vector<256x128xbf16>, vector<128x128xbf16>, vector<256x128xf32> -> vector<256x128xf32>
    %c0_3 = arith.constant 0 : index
    %c0_4 = arith.constant 0 : index
    %3 = vector.load %arg5[%c0_3, %c0_4] : memref<1x128xf32, #tpu.memory_space<vmem>>, vector<1x128xf32>
    %4 = vector.broadcast %3 : vector<1x128xf32> to vector<256x128xf32>
    %5 = arith.addf %2, %4 : vector<256x128xf32>
    %c0_5 = arith.constant 0 : index
    %c0_6 = arith.constant 0 : index
    %6 = vector.load %arg3[%c0_5, %c0_6] : memref<128x128xbf16, #tpu.memory_space<vmem>>, vector<128x128xbf16>
    %cst_7 = arith.constant dense<0.000000e+00> : vector<256x128xf32>
    %7 = tpu.matmul %0, %6, %cst_7 {dimension_numbers = #tpu.dot_dimension_numbers<[1], [0], [0], [1], [0, 0, 1, 1], [], []>} : vector<256x128xbf16>, vector<128x128xbf16>, vector<256x128xf32> -> vector<256x128xf32>
    %c0_8 = arith.constant 0 : index
    %c0_9 = arith.constant 0 : index
    %8 = vector.load %arg4[%c0_8, %c0_9] : memref<128x128xbf16, #tpu.memory_space<vmem>>, vector<128x128xbf16>
    %cst_10 = arith.constant dense<0.000000e+00> : vector<256x128xf32>
    %9 = tpu.matmul %0, %8, %cst_10 {dimension_numbers = #tpu.dot_dimension_numbers<[1], [0], [0], [1], [0, 0, 1, 1], [], []>} : vector<256x128xbf16>, vector<128x128xbf16>, vector<256x128xf32> -> vector<256x128xf32>
    %c0_11 = arith.constant 0 : index
    %c0_12 = arith.constant 0 : index
    %10 = vector.load %arg6[%c0_11, %c0_12] : memref<1x128xf32, #tpu.memory_space<vmem>>, vector<1x128xf32>
    %11 = vector.broadcast %10 : vector<1x128xf32> to vector<256x128xf32>
    %12 = arith.addf %9, %11 : vector<256x128xf32>
    %13 = arith.truncf %5 : vector<256x128xf32> to vector<256x128xbf16>
    %c0_13 = arith.constant 0 : index
    %c0_14 = arith.constant 0 : index
    %14 = vector.load %arg7[%c0_13, %c0_14] : memref<256x128xbf16, #tpu.memory_space<vmem>>, vector<256x128xbf16>
    tpu.vector_store %arg7[%c0_13, %c0_14], %13 {strides = array<i32>} : memref<256x128xbf16, #tpu.memory_space<vmem>>, vector<256x128xbf16>,
    %15 = arith.truncf %7 : vector<256x128xf32> to vector<256x128xbf16>
    %c0_15 = arith.constant 0 : index
    %c0_16 = arith.constant 0 : index
    %16 = vector.load %arg8[%c0_15, %c0_16] : memref<256x128xbf16, #tpu.memory_space<vmem>>, vector<256x128xbf16>
    tpu.vector_store %arg8[%c0_15, %c0_16], %15 {strides = array<i32>} : memref<256x128xbf16, #tpu.memory_space<vmem>>, vector<256x128xbf16>,
    %17 = arith.truncf %12 : vector<256x128xf32> to vector<256x128xbf16>
    %c0_17 = arith.constant 0 : index
    %c0_18 = arith.constant 0 : index
    %18 = vector.load %arg9[%c0_17, %c0_18] : memref<256x128xbf16, #tpu.memory_space<vmem>>, vector<256x128xbf16>
    tpu.vector_store %arg9[%c0_17, %c0_18], %17 {strides = array<i32>} : memref<256x128xbf16, #tpu.memory_space<vmem>>, vector<256x128xbf16>,
    return
  }
  func.func @transform_0(%arg0: i32) -> (i32, i32) {
    %c0_i32 = arith.constant 0 : i32
    %c0_i32_0 = arith.constant 0 : i32
    return %arg0, %c0_i32 : i32, i32
  }
  func.func @transform_1(%arg0: i32) -> (i32, i32) {
    %c0_i32 = arith.constant 0 : i32
    %c0_i32_0 = arith.constant 0 : i32
    %c0_i32_1 = arith.constant 0 : i32
    return %c0_i32, %c0_i32_0 : i32, i32
  }
  func.func @transform_2(%arg0: i32) -> (i32, i32) {
    %c0_i32 = arith.constant 0 : i32
    %c0_i32_0 = arith.constant 0 : i32
    %c0_i32_1 = arith.constant 0 : i32
    return %c0_i32, %c0_i32_0 : i32, i32
  }
  func.func @transform_3(%arg0: i32) -> (i32, i32) {
    %c0_i32 = arith.constant 0 : i32
    %c0_i32_0 = arith.constant 0 : i32
    %c0_i32_1 = arith.constant 0 : i32
    return %c0_i32, %c0_i32_0 : i32, i32
  }
  func.func @transform_4(%arg0: i32) -> (i32, i32) {
    %c0_i32 = arith.constant 0 : i32
    %c0_i32_0 = arith.constant 0 : i32
    %c0_i32_1 = arith.constant 0 : i32
    return %c0_i32, %c0_i32_0 : i32, i32
  }
  func.func @transform_5(%arg0: i32) -> (i32, i32) {
    %c0_i32 = arith.constant 0 : i32
    %c0_i32_0 = arith.constant 0 : i32
    %c0_i32_1 = arith.constant 0 : i32
    return %c0_i32, %c0_i32_0 : i32, i32
  }
  func.func @transform_6(%arg0: i32) -> (i32, i32) {
    %c0_i32 = arith.constant 0 : i32
    %c0_i32_0 = arith.constant 0 : i32
    return %arg0, %c0_i32 : i32, i32
  }
  func.func @transform_7(%arg0: i32) -> (i32, i32) {
    %c0_i32 = arith.constant 0 : i32
    %c0_i32_0 = arith.constant 0 : i32
    return %arg0, %c0_i32 : i32, i32
  }
  func.func @transform_8(%arg0: i32) -> (i32, i32) {
    %c0_i32 = arith.constant 0 : i32
    %c0_i32_0 = arith.constant 0 : i32
    return %arg0, %c0_i32 : i32, i32
  }
}

</mosaic_0001>

<llo_original>
// kernel: tpu_custom_call.1
$region0: #{tpu_custom_call.1}
  #allocation0 [shape = 'u32[]', space=smem, size = 0x4, offset = 0x4, fixed_abs, tag = 'smem constant byte address 0x4 - core index']
  #allocation1 [shape = 'u32[144,128]{1,0:T(1,128)}', space=vmem, size = 0x12000, scoped, tag = 'internal scratch']
  %s0 = inlined_call_operand.hbm [shape: bf16[256,128], index: 0, kind: input, shape index: {}]
  %s1 = inlined_call_operand.hbm [shape: bf16[128,128], index: 1, kind: input, shape index: {}]
  %s2 = inlined_call_operand.hbm [shape: bf16[128,128], index: 2, kind: input, shape index: {}]
  %s3 = inlined_call_operand.hbm [shape: bf16[128,128], index: 3, kind: input, shape index: {}]
  %s4 = inlined_call_operand.hbm [shape: f32[1,128], index: 4, kind: input, shape index: {}]
  %s5 = inlined_call_operand.hbm [shape: f32[1,128], index: 5, kind: input, shape index: {}]
  %s6 = inlined_call_operand.hbm [shape: bf16[256,128], index: 6, kind: output, shape index: {0}]
  %s7 = inlined_call_operand.hbm [shape: bf16[256,128], index: 7, kind: output, shape index: {1}]
  %s8 = inlined_call_operand.hbm [shape: bf16[256,128], index: 8, kind: output, shape index: {2}]
  %9 = xla_tuple %s6, %s7, %s8
  %s10 = sld [smem:[#allocation0]]
  $region74: #{tpu_custom_call.1} parent=0
    _
  %s12 = ssub.s32 1, %s10
  %s13 = scalar_select 0, %s12, %s10
  $region1: #{tpu_custom_call.1} parent=0
    #allocation2 [shape = 'u8[65536]{0}', space=vmem, size = 0x10000, scoped, tag = 'input window, operand 0, single buffered']
    #allocation3 [shape = 's32[1]{0}', space=sflag, size = 0x4, scoped, tag = 'scoped memory for tpu_custom_call.1']
    #allocation4 [shape = 's32[1]{0}', space=sflag, size = 0x4, scoped, tag = 'scoped memory for tpu_custom_call.1']
    #allocation5 [shape = 'u8[32768]{0}', space=vmem, size = 0x8000, scoped, tag = 'input window, operand 1, single buffered']
    #allocation6 [shape = 's32[1]{0}', space=sflag, size = 0x4, scoped, tag = 'scoped memory for tpu_custom_call.1']
    #allocation7 [shape = 'u8[32768]{0}', space=vmem, size = 0x8000, scoped, tag = 'input window, operand 2, single buffered']
    #allocation8 [shape = 'u8[32768]{0}', space=vmem, size = 0x8000, scoped, tag = 'input window, operand 3, single buffered']
    #allocation9 [shape = 's32[1]{0}', space=sflag, size = 0x4, scoped, tag = 'scoped memory for tpu_custom_call.1']
    #allocation10 [shape = 'u8[512]{0}', space=vmem, size = 0x400, scoped, tag = 'input window, operand 4, single buffered']
    #allocation11 [shape = 'u8[512]{0}', space=vmem, size = 0x400, scoped, tag = 'input window, operand 5, single buffered']
    #allocation12 [shape = 's32[1]{0}', space=sflag, size = 0x4, scoped, tag = 'scoped memory for tpu_custom_call.1']
    #allocation13 [shape = 'u8[65536]{0}', space=vmem, size = 0x10000, scoped, tag = 'output window, operand 0, single buffered']
    #allocation14 [shape = 'u8[65536]{0}', space=vmem, size = 0x10000, scoped, tag = 'output window, operand 1, single buffered']
    #allocation15 [shape = 's32[1]{0}', space=sflag, size = 0x4, scoped, tag = 'scoped memory for tpu_custom_call.1']
    #allocation16 [shape = 'u8[65536]{0}', space=vmem, size = 0x10000, scoped, tag = 'output window, operand 2, single buffered']
    %14 = vsyncpa [#allocation3], 0
    %15 = vsyncpa [#allocation6], 0
    %16 = vsyncpa [#allocation9], 0
    %17 = vsyncpa [#allocation12], 0
    %18 = vsyncpa [#allocation4], 0
    %19 = vsyncpa [#allocation15], 0
    // Predicated region
    $region2: #{tpu_custom_call.1} parent=1 // pred_check
      _
    $region3: #{tpu_custom_call.1} parent=1 // pred_check_branch
      %21 = sbr.rel (0) target = $region5
    $region4: #{tpu_custom_call.1} parent=1 // pred_region
      %s23 = ssub.s32 2048, 2048
      %24 = vsyncadd [#allocation3], %s23
      %s25 = sshll.u32 [#allocation2], 4
      %s26 = int_to_ptr.vmem [resolvable:$true] %s25
      %31 = dma.hbm_to_vmem [thread:$0]  %s0, 2048, %s26, [#allocation3], 64, 64, 4
    $region5: #{tpu_custom_call.1} parent=1 // pred_fallthru
      _
    // Predicated region
    $region6: #{tpu_custom_call.1} parent=1 // pred_check
      _
    $region7: #{tpu_custom_call.1} parent=1 // pred_check_branch
      %33 = sbr.rel (0) target = $region9
    $region8: #{tpu_custom_call.1} parent=1 // pred_region
      %s35 = ssub.s32 1024, 1024
      %36 = vsyncadd [#allocation6], %s35
      %s37 = sshll.u32 [#allocation5], 4
      %s38 = int_to_ptr.vmem [resolvable:$true] %s37
      %43 = dma.hbm_to_vmem [thread:$0]  %s1, 1024, %s38, [#allocation6], 64, 64, 4
    $region9: #{tpu_custom_call.1} parent=1 // pred_fallthru
      _
    // Predicated region
    $region10: #{tpu_custom_call.1} parent=1 // pred_check
      _
    $region11: #{tpu_custom_call.1} parent=1 // pred_check_branch
      %45 = sbr.rel (0) target = $region13
    $region12: #{tpu_custom_call.1} parent=1 // pred_region
      %s47 = ssub.s32 1024, 1024
      %48 = vsyncadd [#allocation6], %s47
      %s49 = sshll.u32 [#allocation7], 4
      %s50 = int_to_ptr.vmem [resolvable:$true] %s49
      %55 = dma.hbm_to_vmem [thread:$0]  %s2, 1024, %s50, [#allocation6], 64, 64, 4
    $region13: #{tpu_custom_call.1} parent=1 // pred_fallthru
      _
    // Predicated region
    $region14: #{tpu_custom_call.1} parent=1 // pred_check
      _
    $region15: #{tpu_custom_call.1} parent=1 // pred_check_branch
      %57 = sbr.rel (0) target = $region17
    $region16: #{tpu_custom_call.1} parent=1 // pred_region
      %s59 = ssub.s32 1024, 1024
      %60 = vsyncadd [#allocation9], %s59
      %s61 = sshll.u32 [#allocation8], 4
      %s62 = int_to_ptr.vmem [resolvable:$true] %s61
      %67 = dma.hbm_to_vmem [thread:$0]  %s3, 1024, %s62, [#allocation9], 64, 64, 4
    $region17: #{tpu_custom_call.1} parent=1 // pred_fallthru
      _
    // Predicated region
    $region18: #{tpu_custom_call.1} parent=1 // pred_check
      _
    $region19: #{tpu_custom_call.1} parent=1 // pred_check_branch
      %69 = sbr.rel (0) target = $region21
    $region20: #{tpu_custom_call.1} parent=1 // pred_region
      %s71 = ssub.s32 16, 16
      %72 = vsyncadd [#allocation9], %s71
      %s74 = sshll.u32 [#allocation10], 4
      %s75 = int_to_ptr.vmem [resolvable:$true] %s74
      %77 = dma.hbm_to_vmem [thread:$0]  %s4, 16, %s75, [#allocation9]
    $region21: #{tpu_custom_call.1} parent=1 // pred_fallthru
      _
    // Predicated region
    $region22: #{tpu_custom_call.1} parent=1 // pred_check
      _
    $region23: #{tpu_custom_call.1} parent=1 // pred_check_branch
      %79 = sbr.rel (0) target = $region25
    $region24: #{tpu_custom_call.1} parent=1 // pred_region
      %s81 = ssub.s32 16, 16
      %82 = vsyncadd [#allocation12], %s81
      %s84 = sshll.u32 [#allocation11], 4
      %s85 = int_to_ptr.vmem [resolvable:$true] %s84
      %87 = dma.hbm_to_vmem [thread:$0]  %s5, 16, %s85, [#allocation12]
    $region25: #{tpu_custom_call.1} parent=1 // pred_fallthru
      _
    // Predicated region
    $region26: #{tpu_custom_call.1} parent=1 // pred_check
      _
    $region27: #{tpu_custom_call.1} parent=1 // pred_check_branch
      %89 = sbr.rel (0) target = $region29
    $region28: #{tpu_custom_call.1} parent=1 // pred_region
      %90 = dma.done [#allocation3], 2048
    $region29: #{tpu_custom_call.1} parent=1 // pred_fallthru
      _
    // Predicated region
    $region30: #{tpu_custom_call.1} parent=1 // pred_check
      _
    $region31: #{tpu_custom_call.1} parent=1 // pred_check_branch
      %92 = sbr.rel (0) target = $region33
    $region32: #{tpu_custom_call.1} parent=1 // pred_region
      %93 = dma.done [#allocation6], 1024
    $region33: #{tpu_custom_call.1} parent=1 // pred_fallthru
      _
    // Predicated region
    $region34: #{tpu_custom_call.1} parent=1 // pred_check
      _
    $region35: #{tpu_custom_call.1} parent=1 // pred_check_branch
      %95 = sbr.rel (0) target = $region37
    $region36: #{tpu_custom_call.1} parent=1 // pred_region
      %96 = dma.done [#allocation6], 1024
    $region37: #{tpu_custom_call.1} parent=1 // pred_fallthru
      _
    // Predicated region
    $region38: #{tpu_custom_call.1} parent=1 // pred_check
      _
    $region39: #{tpu_custom_call.1} parent=1 // pred_check_branch
      %98 = sbr.rel (0) target = $region41
    $region40: #{tpu_custom_call.1} parent=1 // pred_region
      %99 = dma.done [#allocation9], 1024
    $region41: #{tpu_custom_call.1} parent=1 // pred_fallthru
      _
    // Predicated region
    $region42: #{tpu_custom_call.1} parent=1 // pred_check
      _
    $region43: #{tpu_custom_call.1} parent=1 // pred_check_branch
      %101 = sbr.rel (0) target = $region45
    $region44: #{tpu_custom_call.1} parent=1 // pred_region
      %102 = dma.done [#allocation9], 16
    $region45: #{tpu_custom_call.1} parent=1 // pred_fallthru
      _
    // Predicated region
    $region46: #{tpu_custom_call.1} parent=1 // pred_check
      _
    $region47: #{tpu_custom_call.1} parent=1 // pred_check_branch
      %104 = sbr.rel (0) target = $region49
    $region48: #{tpu_custom_call.1} parent=1 // pred_region
      %105 = dma.done [#allocation12], 16
    $region49: #{tpu_custom_call.1} parent=1 // pred_fallthru
      _
    %v107 = vld [vmem:[#allocation2] sm:$0xf]
    %v108 = vld [vmem:[#allocation2 + $0x4] sm:$0xf]
    %v109 = vld [vmem:[#allocation2 + $0x8] sm:$0xf]
    %v110 = vld [vmem:[#allocation2 + $0xc] sm:$0xf]
    %v111 = vld [vmem:[#allocation2 + $0x10] sm:$0xf]
    %v112 = vld [vmem:[#allocation2 + $0x14] sm:$0xf]
    %v113 = vld [vmem:[#allocation2 + $0x18] sm:$0xf]
    %v114 = vld [vmem:[#allocation2 + $0x1c] sm:$0xf]
    %v115 = vld [vmem:[#allocation2 + $0x20] sm:$0xf]
    %v116 = vld [vmem:[#allocation2 + $0x24] sm:$0xf]
    %v117 = vld [vmem:[#allocation2 + $0x28] sm:$0xf]
    %v118 = vld [vmem:[#allocation2 + $0x2c] sm:$0xf]
    %v119 = vld [vmem:[#allocation2 + $0x30] sm:$0xf]
    %v120 = vld [vmem:[#allocation2 + $0x34] sm:$0xf]
    %v121 = vld [vmem:[#allocation2 + $0x38] sm:$0xf]
    %v122 = vld [vmem:[#allocation2 + $0x3c] sm:$0xf]
    %v123 = vld [vmem:[#allocation2 + $0x40] sm:$0xf]
    %v124 = vld [vmem:[#allocation2 + $0x44] sm:$0xf]
    %v125 = vld [vmem:[#allocation2 + $0x48] sm:$0xf]
    %v126 = vld [vmem:[#allocation2 + $0x4c] sm:$0xf]
    %v127 = vld [vmem:[#allocation2 + $0x50] sm:$0xf]
    %v128 = vld [vmem:[#allocation2 + $0x54] sm:$0xf]
    %v129 = vld [vmem:[#allocation2 + $0x58] sm:$0xf]
    %v130 = vld [vmem:[#allocation2 + $0x5c] sm:$0xf]
    %v131 = vld [vmem:[#allocation2 + $0x60] sm:$0xf]
    %v132 = vld [vmem:[#allocation2 + $0x64] sm:$0xf]
    %v133 = vld [vmem:[#allocation2 + $0x68] sm:$0xf]
    %v134 = vld [vmem:[#allocation2 + $0x6c] sm:$0xf]
    %v135 = vld [vmem:[#allocation2 + $0x70] sm:$0xf]
    %v136 = vld [vmem:[#allocation2 + $0x74] sm:$0xf]
    %v137 = vld [vmem:[#allocation2 + $0x78] sm:$0xf]
    %v138 = vld [vmem:[#allocation2 + $0x7c] sm:$0xf]
    %v139 = vld [vmem:[#allocation5] sm:$0xf]
    %v140 = vld [vmem:[#allocation5 + $0x4] sm:$0xf]
    %v141 = vld [vmem:[#allocation5 + $0x8] sm:$0xf]
    %v142 = vld [vmem:[#allocation5 + $0xc] sm:$0xf]
    %v143 = vld [vmem:[#allocation5 + $0x10] sm:$0xf]
    %v144 = vld [vmem:[#allocation5 + $0x14] sm:$0xf]
    %v145 = vld [vmem:[#allocation5 + $0x18] sm:$0xf]
    %v146 = vld [vmem:[#allocation5 + $0x1c] sm:$0xf]
    %v147 = vld [vmem:[#allocation5 + $0x20] sm:$0xf]
    %v148 = vld [vmem:[#allocation5 + $0x24] sm:$0xf]
    %v149 = vld [vmem:[#allocation5 + $0x28] sm:$0xf]
    %v150 = vld [vmem:[#allocation5 + $0x2c] sm:$0xf]
    %v151 = vld [vmem:[#allocation5 + $0x30] sm:$0xf]
    %v152 = vld [vmem:[#allocation5 + $0x34] sm:$0xf]
    %v153 = vld [vmem:[#allocation5 + $0x38] sm:$0xf]
    %v154 = vld [vmem:[#allocation5 + $0x3c] sm:$0xf]
    %v155 = vld [vmem:[#allocation10] sm:$0x1]
    %v157 = vlaneseq
    %v158 = vshrl.u32 %v157, 7
    %v159 = vsub.s32 0, %v158
    %v160 = vrot.slane %v155, %v159
    %v194 = vunpack.c.l.b16 %v107
    %v195 = vunpack.c.l.b16 %v108
    %v196 = vunpack.c.l.b16 %v109
    %v197 = vunpack.c.l.b16 %v110
    %v198 = vunpack.c.l.b16 %v111
    %v199 = vunpack.c.l.b16 %v112
    %v200 = vunpack.c.l.b16 %v113
    %v201 = vunpack.c.l.b16 %v114
    %v202 = vunpack.c.l.b16 %v115
    %v203 = vunpack.c.l.b16 %v116
    %v204 = vunpack.c.l.b16 %v117
    %v205 = vunpack.c.l.b16 %v118
    %v206 = vunpack.c.l.b16 %v119
    %v207 = vunpack.c.l.b16 %v120
    %v208 = vunpack.c.l.b16 %v121
    %v209 = vunpack.c.l.b16 %v122
    %v210 = vunpack.c.l.b16 %v123
    %v211 = vunpack.c.l.b16 %v124
    %v212 = vunpack.c.l.b16 %v125
    %v213 = vunpack.c.l.b16 %v126
    %v214 = vunpack.c.l.b16 %v127
    %v215 = vunpack.c.l.b16 %v128
    %v216 = vunpack.c.l.b16 %v129
    %v217 = vunpack.c.l.b16 %v130
    %v218 = vunpack.c.l.b16 %v131
    %v219 = vunpack.c.l.b16 %v132
    %v220 = vunpack.c.l.b16 %v133
    %v221 = vunpack.c.l.b16 %v134
    %v222 = vunpack.c.l.b16 %v135
    %v223 = vunpack.c.l.b16 %v136
    %v224 = vunpack.c.l.b16 %v137
    %v225 = vunpack.c.l.b16 %v138
    %v226 = vpack.c.b16 %v195, %v194
    %v227 = vpack.c.b16 %v197, %v196
    %v228 = vpack.c.b16 %v199, %v198
    %v229 = vpack.c.b16 %v201, %v200
    %v230 = vpack.c.b16 %v203, %v202
    %v231 = vpack.c.b16 %v205, %v204
    %v232 = vpack.c.b16 %v207, %v206
    %v233 = vpack.c.b16 %v209, %v208
    %v234 = vpack.c.b16 %v211, %v210
    %v235 = vpack.c.b16 %v213, %v212
    %v236 = vpack.c.b16 %v215, %v214
    %v237 = vpack.c.b16 %v217, %v216
    %v238 = vpack.c.b16 %v219, %v218
    %v239 = vpack.c.b16 %v221, %v220
    %v240 = vpack.c.b16 %v223, %v222
    %v241 = vpack.c.b16 %v225, %v224
    %v274 = vunpack.c.l.b16 %v139
    %v275 = vunpack.c.l.b16 %v140
    %v276 = vunpack.c.l.b16 %v141
    %v277 = vunpack.c.l.b16 %v142
    %v278 = vunpack.c.l.b16 %v143
    %v279 = vunpack.c.l.b16 %v144
    %v280 = vunpack.c.l.b16 %v145
    %v281 = vunpack.c.l.b16 %v146
    %v282 = vunpack.c.l.b16 %v147
    %v283 = vunpack.c.l.b16 %v148
    %v284 = vunpack.c.l.b16 %v149
    %v285 = vunpack.c.l.b16 %v150
    %v286 = vunpack.c.l.b16 %v151
    %v287 = vunpack.c.l.b16 %v152
    %v288 = vunpack.c.l.b16 %v153
    %v289 = vunpack.c.l.b16 %v154
    %v290 = vpack.c.b16 %v275, %v274
    %v291 = vpack.c.b16 %v277, %v276
    %v292 = vpack.c.b16 %v279, %v278
    %v293 = vpack.c.b16 %v281, %v280
    %v294 = vpack.c.b16 %v283, %v282
    %v295 = vpack.c.b16 %v285, %v284
    %v296 = vpack.c.b16 %v287, %v286
    %v297 = vpack.c.b16 %v289, %v288
    %306 = vmatprep.subr.bf16.mxu0 0
    %307 = vmatpush1.bf16.msra.mxu0 %v290
    %308 = vmatprep.subr.bf16.mxu0 0
    %309 = vmatpush1.bf16.msra.mxu0 %v291
    %310 = vmatprep.subr.bf16.mxu0 0
    %311 = vmatpush1.bf16.msra.mxu0 %v292
    %312 = vmatprep.subr.bf16.mxu0 0
    %313 = vmatpush1.bf16.msra.mxu0 %v293
    %314 = vmatprep.subr.bf16.mxu0 0
    %315 = vmatpush1.bf16.msra.mxu0 %v294
    %316 = vmatprep.subr.bf16.mxu0 0
    %317 = vmatpush1.bf16.msra.mxu0 %v295
    %318 = vmatprep.subr.bf16.mxu0 0
    %319 = vmatpush1.bf16.msra.mxu0 %v296
    %320 = vmatprep.subr.bf16.mxu0 0
    %321 = vmatpush1.bf16.msra.mxu0 %v297
    %322 = vmatprep.subr.bf16.mxu0 0
    %323 = vmatpush1.bf16.msra.mxu0 0
    %324 = vmatprep.subr.bf16.mxu0 0
    %325 = vmatpush1.bf16.msra.mxu0 0
    %326 = vmatprep.subr.bf16.mxu0 0
    %327 = vmatpush1.bf16.msra.mxu0 0
    %328 = vmatprep.subr.bf16.mxu0 0
    %329 = vmatpush1.bf16.msra.mxu0 0
    %330 = vmatprep.subr.bf16.mxu0 0
    %331 = vmatpush1.bf16.msra.mxu0 0
    %332 = vmatprep.subr.bf16.mxu0 0
    %333 = vmatpush1.bf16.msra.mxu0 0
    %334 = vmatprep.subr.bf16.mxu0 0
    %335 = vmatpush1.bf16.msra.mxu0 0
    %336 = vmatprep.subr.bf16.mxu0 0
    %337 = vmatpush1.bf16.msra.mxu0 0
    %338 = vmatprep.mubr.bf16.mxu0 0
    %339 = vmatmul.mubr.bf16.gmra.mrb[0].mxu0 %v226
    %v340 = vpop.f32.mrb[0].mxu0
    %v341 = vadd.f32 %v160, %v340
    %v342 = vpop.f32.mrb[0].mxu0
    %v343 = vpop.f32.mrb[0].mxu0
    %v344 = vadd.f32 %v160, %v343
    %v345 = vpop.f32.mrb[0].mxu0
    %346 = vmatprep.mubr.bf16.mxu0 0
    %347 = vmatmul.mubr.bf16.gmra.mrb[0].mxu0 %v227
    %v348 = vpop.f32.mrb[0].mxu0
    %v349 = vadd.f32 %v160, %v348
    %v350 = vpop.f32.mrb[0].mxu0
    %v351 = vpop.f32.mrb[0].mxu0
    %v352 = vadd.f32 %v160, %v351
    %v353 = vpop.f32.mrb[0].mxu0
    %354 = vmatprep.mubr.bf16.mxu0 0
    %355 = vmatmul.mubr.bf16.gmra.mrb[0].mxu0 %v228
    %v356 = vpop.f32.mrb[0].mxu0
    %v357 = vadd.f32 %v160, %v356
    %v358 = vpop.f32.mrb[0].mxu0
    %v359 = vpop.f32.mrb[0].mxu0
    %v360 = vadd.f32 %v160, %v359
    %v361 = vpop.f32.mrb[0].mxu0
    %362 = vmatprep.mubr.bf16.mxu0 0
    %363 = vmatmul.mubr.bf16.gmra.mrb[0].mxu0 %v229
    %v364 = vpop.f32.mrb[0].mxu0
    %v365 = vadd.f32 %v160, %v364
    %v366 = vpop.f32.mrb[0].mxu0
    %v367 = vpop.f32.mrb[0].mxu0
    %v368 = vadd.f32 %v160, %v367
    %v369 = vpop.f32.mrb[0].mxu0
    %370 = vmatprep.mubr.bf16.mxu0 0
    %371 = vmatmul.mubr.bf16.gmra.mrb[0].mxu0 %v230
    %v372 = vpop.f32.mrb[0].mxu0
    %v373 = vadd.f32 %v160, %v372
    %v374 = vpop.f32.mrb[0].mxu0
    %v375 = vpop.f32.mrb[0].mxu0
    %v376 = vadd.f32 %v160, %v375
    %v377 = vpop.f32.mrb[0].mxu0
    %378 = vmatprep.mubr.bf16.mxu0 0
    %379 = vmatmul.mubr.bf16.gmra.mrb[0].mxu0 %v231
    %v380 = vpop.f32.mrb[0].mxu0
    %v381 = vadd.f32 %v160, %v380
    %v382 = vpop.f32.mrb[0].mxu0
    %v383 = vpop.f32.mrb[0].mxu0
    %v384 = vadd.f32 %v160, %v383
    %v385 = vpop.f32.mrb[0].mxu0
    %386 = vmatprep.mubr.bf16.mxu0 0
    %387 = vmatmul.mubr.bf16.gmra.mrb[0].mxu0 %v232
    %v388 = vpop.f32.mrb[0].mxu0
    %v389 = vadd.f32 %v160, %v388
    %v390 = vpop.f32.mrb[0].mxu0
    %v391 = vpop.f32.mrb[0].mxu0
    %v392 = vadd.f32 %v160, %v391
    %v393 = vpop.f32.mrb[0].mxu0
    %394 = vmatprep.mubr.bf16.mxu0 0
    %395 = vmatmul.mubr.bf16.gmra.mrb[0].mxu0 %v233
    %v396 = vpop.f32.mrb[0].mxu0
    %v397 = vadd.f32 %v160, %v396
    %v398 = vpop.f32.mrb[0].mxu0
    %v399 = vpop.f32.mrb[0].mxu0
    %v400 = vadd.f32 %v160, %v399
    %v401 = vpop.f32.mrb[0].mxu0
    %402 = vmatprep.mubr.bf16.mxu0 0
    %403 = vmatmul.mubr.bf16.gmra.mrb[0].mxu0 %v234
    %v404 = vpop.f32.mrb[0].mxu0
    %v405 = vadd.f32 %v160, %v404
    %v406 = vpop.f32.mrb[0].mxu0
    %v407 = vpop.f32.mrb[0].mxu0
    %v408 = vadd.f32 %v160, %v407
    %v409 = vpop.f32.mrb[0].mxu0
    %410 = vmatprep.mubr.bf16.mxu0 0
    %411 = vmatmul.mubr.bf16.gmra.mrb[0].mxu0 %v235
    %v412 = vpop.f32.mrb[0].mxu0
    %v413 = vadd.f32 %v160, %v412
    %v414 = vpop.f32.mrb[0].mxu0
    %v415 = vpop.f32.mrb[0].mxu0
    %v416 = vadd.f32 %v160, %v415
    %v417 = vpop.f32.mrb[0].mxu0
    %418 = vmatprep.mubr.bf16.mxu0 0
    %419 = vmatmul.mubr.bf16.gmra.mrb[0].mxu0 %v236
    %v420 = vpop.f32.mrb[0].mxu0
    %v421 = vadd.f32 %v160, %v420
    %v422 = vpop.f32.mrb[0].mxu0
    %v423 = vpop.f32.mrb[0].mxu0
    %v424 = vadd.f32 %v160, %v423
    %v425 = vpop.f32.mrb[0].mxu0
    %426 = vmatprep.mubr.bf16.mxu0 0
    %427 = vmatmul.mubr.bf16.gmra.mrb[0].mxu0 %v237
    %v428 = vpop.f32.mrb[0].mxu0
    %v429 = vadd.f32 %v160, %v428
    %v430 = vpop.f32.mrb[0].mxu0
    %v431 = vpop.f32.mrb[0].mxu0
    %v432 = vadd.f32 %v160, %v431
    %v433 = vpop.f32.mrb[0].mxu0
    %434 = vmatprep.mubr.bf16.mxu0 0
    %435 = vmatmul.mubr.bf16.gmra.mrb[0].mxu0 %v238
    %v436 = vpop.f32.mrb[0].mxu0
    %v437 = vadd.f32 %v160, %v436
    %v438 = vpop.f32.mrb[0].mxu0
    %v439 = vpop.f32.mrb[0].mxu0
    %v440 = vadd.f32 %v160, %v439
    %v441 = vpop.f32.mrb[0].mxu0
    %442 = vmatprep.mubr.bf16.mxu0 0
    %443 = vmatmul.mubr.bf16.gmra.mrb[0].mxu0 %v239
    %v444 = vpop.f32.mrb[0].mxu0
    %v445 = vadd.f32 %v160, %v444
    %v446 = vpop.f32.mrb[0].mxu0
    %v447 = vpop.f32.mrb[0].mxu0
    %v448 = vadd.f32 %v160, %v447
    %v449 = vpop.f32.mrb[0].mxu0
    %450 = vmatprep.mubr.bf16.mxu0 0
    %451 = vmatmul.mubr.bf16.gmra.mrb[0].mxu0 %v240
    %v452 = vpop.f32.mrb[0].mxu0
    %v453 = vadd.f32 %v160, %v452
    %v454 = vpop.f32.mrb[0].mxu0
    %v455 = vpop.f32.mrb[0].mxu0
    %v456 = vadd.f32 %v160, %v455
    %v457 = vpop.f32.mrb[0].mxu0
    %458 = vmatprep.mubr.bf16.mxu0 0
    %459 = vmatmul.mubr.bf16.gmra.mrb[0].mxu0 %v241
    %v460 = vpop.f32.mrb[0].mxu0
    %v461 = vadd.f32 %v160, %v460
    %v462 = vpop.f32.mrb[0].mxu0
    %v463 = vpop.f32.mrb[0].mxu0
    %v464 = vadd.f32 %v160, %v463
    %v465 = vpop.f32.mrb[0].mxu0
    %466 = vdwg.mxu0
    %v467 = vld [vmem:[#allocation7] sm:$0xf]
    %v468 = vld [vmem:[#allocation7 + $0x4] sm:$0xf]
    %v469 = vld [vmem:[#allocation7 + $0x8] sm:$0xf]
    %v470 = vld [vmem:[#allocation7 + $0xc] sm:$0xf]
    %v471 = vld [vmem:[#allocation7 + $0x10] sm:$0xf]
    %v472 = vld [vmem:[#allocation7 + $0x14] sm:$0xf]
    %v473 = vld [vmem:[#allocation7 + $0x18] sm:$0xf]
    %v474 = vld [vmem:[#allocation7 + $0x1c] sm:$0xf]
    %v475 = vld [vmem:[#allocation7 + $0x20] sm:$0xf]
    %v476 = vld [vmem:[#allocation7 + $0x24] sm:$0xf]
    %v477 = vld [vmem:[#allocation7 + $0x28] sm:$0xf]
    %v478 = vld [vmem:[#allocation7 + $0x2c] sm:$0xf]
    %v479 = vld [vmem:[#allocation7 + $0x30] sm:$0xf]
    %v480 = vld [vmem:[#allocation7 + $0x34] sm:$0xf]
    %v481 = vld [vmem:[#allocation7 + $0x38] sm:$0xf]
    %v482 = vld [vmem:[#allocation7 + $0x3c] sm:$0xf]
    %v499 = vunpack.c.l.b16 %v467
    %v500 = vunpack.c.l.b16 %v468
    %v501 = vunpack.c.l.b16 %v469
    %v502 = vunpack.c.l.b16 %v470
    %v503 = vunpack.c.l.b16 %v471
    %v504 = vunpack.c.l.b16 %v472
    %v505 = vunpack.c.l.b16 %v473
    %v506 = vunpack.c.l.b16 %v474
    %v507 = vunpack.c.l.b16 %v475
    %v508 = vunpack.c.l.b16 %v476
    %v509 = vunpack.c.l.b16 %v477
    %v510 = vunpack.c.l.b16 %v478
    %v511 = vunpack.c.l.b16 %v479
    %v512 = vunpack.c.l.b16 %v480
    %v513 = vunpack.c.l.b16 %v481
    %v514 = vunpack.c.l.b16 %v482
    %v515 = vpack.c.b16 %v500, %v499
    %v516 = vpack.c.b16 %v502, %v501
    %v517 = vpack.c.b16 %v504, %v503
    %v518 = vpack.c.b16 %v506, %v505
    %v519 = vpack.c.b16 %v508, %v507
    %v520 = vpack.c.b16 %v510, %v509
    %v521 = vpack.c.b16 %v512, %v511
    %v522 = vpack.c.b16 %v514, %v513
    %531 = vmatprep.subr.bf16.mxu0 0
    %532 = vmatpush1.bf16.msra.mxu0 %v515
    %533 = vmatprep.subr.bf16.mxu0 0
    %534 = vmatpush1.bf16.msra.mxu0 %v516
    %535 = vmatprep.subr.bf16.mxu0 0
    %536 = vmatpush1.bf16.msra.mxu0 %v517
    %537 = vmatprep.subr.bf16.mxu0 0
    %538 = vmatpush1.bf16.msra.mxu0 %v518
    %539 = vmatprep.subr.bf16.mxu0 0
    %540 = vmatpush1.bf16.msra.mxu0 %v519
    %541 = vmatprep.subr.bf16.mxu0 0
    %542 = vmatpush1.bf16.msra.mxu0 %v520
    %543 = vmatprep.subr.bf16.mxu0 0
    %544 = vmatpush1.bf16.msra.mxu0 %v521
    %545 = vmatprep.subr.bf16.mxu0 0
    %546 = vmatpush1.bf16.msra.mxu0 %v522
    %547 = vmatprep.subr.bf16.mxu0 0
    %548 = vmatpush1.bf16.msra.mxu0 0
    %549 = vmatprep.subr.bf16.mxu0 0
    %550 = vmatpush1.bf16.msra.mxu0 0
    %551 = vmatprep.subr.bf16.mxu0 0
    %552 = vmatpush1.bf16.msra.mxu0 0
    %553 = vmatprep.subr.bf16.mxu0 0
    %554 = vmatpush1.bf16.msra.mxu0 0
    %555 = vmatprep.subr.bf16.mxu0 0
    %556 = vmatpush1.bf16.msra.mxu0 0
    %557 = vmatprep.subr.bf16.mxu0 0
    %558 = vmatpush1.bf16.msra.mxu0 0
    %559 = vmatprep.subr.bf16.mxu0 0
    %560 = vmatpush1.bf16.msra.mxu0 0
    %561 = vmatprep.subr.bf16.mxu0 0
    %562 = vmatpush1.bf16.msra.mxu0 0
    %563 = vmatprep.mubr.bf16.mxu0 0
    %564 = vmatmul.mubr.bf16.gmra.mrb[0].mxu0 %v226
    %v565 = vpop.f32.mrb[0].mxu0
    %v566 = vadd.f32 0.0, %v565
    %v567 = vpop.f32.mrb[0].mxu0
    %v568 = vpop.f32.mrb[0].mxu0
    %v569 = vadd.f32 0.0, %v568
    %v570 = vpop.f32.mrb[0].mxu0
    %571 = vmatprep.mubr.bf16.mxu0 0
    %572 = vmatmul.mubr.bf16.gmra.mrb[0].mxu0 %v227
    %v573 = vpop.f32.mrb[0].mxu0
    %v574 = vadd.f32 0.0, %v573
    %v575 = vpop.f32.mrb[0].mxu0
    %v576 = vpop.f32.mrb[0].mxu0
    %v577 = vadd.f32 0.0, %v576
    %v578 = vpop.f32.mrb[0].mxu0
    %579 = vmatprep.mubr.bf16.mxu0 0
    %580 = vmatmul.mubr.bf16.gmra.mrb[0].mxu0 %v228
    %v581 = vpop.f32.mrb[0].mxu0
    %v582 = vadd.f32 0.0, %v581
    %v583 = vpop.f32.mrb[0].mxu0
    %v584 = vpop.f32.mrb[0].mxu0
    %v585 = vadd.f32 0.0, %v584
    %v586 = vpop.f32.mrb[0].mxu0
    %587 = vmatprep.mubr.bf16.mxu0 0
    %588 = vmatmul.mubr.bf16.gmra.mrb[0].mxu0 %v229
    %v589 = vpop.f32.mrb[0].mxu0
    %v590 = vadd.f32 0.0, %v589
    %v591 = vpop.f32.mrb[0].mxu0
    %v592 = vpop.f32.mrb[0].mxu0
    %v593 = vadd.f32 0.0, %v592
    %v594 = vpop.f32.mrb[0].mxu0
    %595 = vmatprep.mubr.bf16.mxu0 0
    %596 = vmatmul.mubr.bf16.gmra.mrb[0].mxu0 %v230
    %v597 = vpop.f32.mrb[0].mxu0
    %v598 = vadd.f32 0.0, %v597
    %v599 = vpop.f32.mrb[0].mxu0
    %v600 = vpop.f32.mrb[0].mxu0
    %v601 = vadd.f32 0.0, %v600
    %v602 = vpop.f32.mrb[0].mxu0
    %603 = vmatprep.mubr.bf16.mxu0 0
    %604 = vmatmul.mubr.bf16.gmra.mrb[0].mxu0 %v231
    %v605 = vpop.f32.mrb[0].mxu0
    %v606 = vadd.f32 0.0, %v605
    %v607 = vpop.f32.mrb[0].mxu0
    %v608 = vpop.f32.mrb[0].mxu0
    %v609 = vadd.f32 0.0, %v608
    %v610 = vpop.f32.mrb[0].mxu0
    %611 = vmatprep.mubr.bf16.mxu0 0
    %612 = vmatmul.mubr.bf16.gmra.mrb[0].mxu0 %v232
    %v613 = vpop.f32.mrb[0].mxu0
    %v614 = vadd.f32 0.0, %v613
    %v615 = vpop.f32.mrb[0].mxu0
    %v616 = vpop.f32.mrb[0].mxu0
    %v617 = vadd.f32 0.0, %v616
    %v618 = vpop.f32.mrb[0].mxu0
    %619 = vmatprep.mubr.bf16.mxu0 0
    %620 = vmatmul.mubr.bf16.gmra.mrb[0].mxu0 %v233
    %v621 = vpop.f32.mrb[0].mxu0
    %v622 = vadd.f32 0.0, %v621
    %v623 = vpop.f32.mrb[0].mxu0
    %v624 = vpop.f32.mrb[0].mxu0
    %v625 = vadd.f32 0.0, %v624
    %v626 = vpop.f32.mrb[0].mxu0
    %627 = vmatprep.mubr.bf16.mxu0 0
    %628 = vmatmul.mubr.bf16.gmra.mrb[0].mxu0 %v234
    %v629 = vpop.f32.mrb[0].mxu0
    %v630 = vadd.f32 0.0, %v629
    %v631 = vpop.f32.mrb[0].mxu0
    %v632 = vpop.f32.mrb[0].mxu0
    %v633 = vadd.f32 0.0, %v632
    %v634 = vpop.f32.mrb[0].mxu0
    %635 = vmatprep.mubr.bf16.mxu0 0
    %636 = vmatmul.mubr.bf16.gmra.mrb[0].mxu0 %v235
    %v637 = vpop.f32.mrb[0].mxu0
    %v638 = vadd.f32 0.0, %v637
    %v639 = vpop.f32.mrb[0].mxu0
    %v640 = vpop.f32.mrb[0].mxu0
    %v641 = vadd.f32 0.0, %v640
    %v642 = vpop.f32.mrb[0].mxu0
    %643 = vmatprep.mubr.bf16.mxu0 0
    %644 = vmatmul.mubr.bf16.gmra.mrb[0].mxu0 %v236
    %v645 = vpop.f32.mrb[0].mxu0
    %v646 = vadd.f32 0.0, %v645
    %v647 = vpop.f32.mrb[0].mxu0
    %v648 = vpop.f32.mrb[0].mxu0
    %v649 = vadd.f32 0.0, %v648
    %v650 = vpop.f32.mrb[0].mxu0
    %651 = vmatprep.mubr.bf16.mxu0 0
    %652 = vmatmul.mubr.bf16.gmra.mrb[0].mxu0 %v237
    %v653 = vpop.f32.mrb[0].mxu0
    %v654 = vadd.f32 0.0, %v653
    %v655 = vpop.f32.mrb[0].mxu0
    %v656 = vpop.f32.mrb[0].mxu0
    %v657 = vadd.f32 0.0, %v656
    %v658 = vpop.f32.mrb[0].mxu0
    %659 = vmatprep.mubr.bf16.mxu0 0
    %660 = vmatmul.mubr.bf16.gmra.mrb[0].mxu0 %v238
    %v661 = vpop.f32.mrb[0].mxu0
    %v662 = vadd.f32 0.0, %v661
    %v663 = vpop.f32.mrb[0].mxu0
    %v664 = vpop.f32.mrb[0].mxu0
    %v665 = vadd.f32 0.0, %v664
    %v666 = vpop.f32.mrb[0].mxu0
    %667 = vmatprep.mubr.bf16.mxu0 0
    %668 = vmatmul.mubr.bf16.gmra.mrb[0].mxu0 %v239
    %v669 = vpop.f32.mrb[0].mxu0
    %v670 = vadd.f32 0.0, %v669
    %v671 = vpop.f32.mrb[0].mxu0
    %v672 = vpop.f32.mrb[0].mxu0
    %v673 = vadd.f32 0.0, %v672
    %v674 = vpop.f32.mrb[0].mxu0
    %675 = vmatprep.mubr.bf16.mxu0 0
    %676 = vmatmul.mubr.bf16.gmra.mrb[0].mxu0 %v240
    %v677 = vpop.f32.mrb[0].mxu0
    %v678 = vadd.f32 0.0, %v677
    %v679 = vpop.f32.mrb[0].mxu0
    %v680 = vpop.f32.mrb[0].mxu0
    %v681 = vadd.f32 0.0, %v680
    %v682 = vpop.f32.mrb[0].mxu0
    %683 = vmatprep.mubr.bf16.mxu0 0
    %684 = vmatmul.mubr.bf16.gmra.mrb[0].mxu0 %v241
    %v685 = vpop.f32.mrb[0].mxu0
    %v686 = vadd.f32 0.0, %v685
    %v687 = vpop.f32.mrb[0].mxu0
    %v688 = vpop.f32.mrb[0].mxu0
    %v689 = vadd.f32 0.0, %v688
    %v690 = vpop.f32.mrb[0].mxu0
    %691 = vdwg.mxu0
    %v692 = vld [vmem:[#allocation8] sm:$0xf]
    %v693 = vld [vmem:[#allocation8 + $0x4] sm:$0xf]
    %v694 = vld [vmem:[#allocation8 + $0x8] sm:$0xf]
    %v695 = vld [vmem:[#allocation8 + $0xc] sm:$0xf]
    %v696 = vld [vmem:[#allocation8 + $0x10] sm:$0xf]
    %v697 = vld [vmem:[#allocation8 + $0x14] sm:$0xf]
    %v698 = vld [vmem:[#allocation8 + $0x18] sm:$0xf]
    %v699 = vld [vmem:[#allocation8 + $0x1c] sm:$0xf]
    %v700 = vld [vmem:[#allocation8 + $0x20] sm:$0xf]
    %v701 = vld [vmem:[#allocation8 + $0x24] sm:$0xf]
    %v702 = vld [vmem:[#allocation8 + $0x28] sm:$0xf]
    %v703 = vld [vmem:[#allocation8 + $0x2c] sm:$0xf]
    %v704 = vld [vmem:[#allocation8 + $0x30] sm:$0xf]
    %v705 = vld [vmem:[#allocation8 + $0x34] sm:$0xf]
    %v706 = vld [vmem:[#allocation8 + $0x38] sm:$0xf]
    %v707 = vld [vmem:[#allocation8 + $0x3c] sm:$0xf]
    %v708 = vld [vmem:[#allocation11] sm:$0x1]
    %v710 = vlaneseq
    %v711 = vshrl.u32 %v710, 7
    %v712 = vsub.s32 0, %v711
    %v713 = vrot.slane %v708, %v712
    %v731 = vunpack.c.l.b16 %v692
    %v732 = vunpack.c.l.b16 %v693
    %v733 = vunpack.c.l.b16 %v694
    %v734 = vunpack.c.l.b16 %v695
    %v735 = vunpack.c.l.b16 %v696
    %v736 = vunpack.c.l.b16 %v697
    %v737 = vunpack.c.l.b16 %v698
    %v738 = vunpack.c.l.b16 %v699
    %v739 = vunpack.c.l.b16 %v700
    %v740 = vunpack.c.l.b16 %v701
    %v741 = vunpack.c.l.b16 %v702
    %v742 = vunpack.c.l.b16 %v703
    %v743 = vunpack.c.l.b16 %v704
    %v744 = vunpack.c.l.b16 %v705
    %v745 = vunpack.c.l.b16 %v706
    %v746 = vunpack.c.l.b16 %v707
    %v747 = vpack.c.b16 %v732, %v731
    %v748 = vpack.c.b16 %v734, %v733
    %v749 = vpack.c.b16 %v736, %v735
    %v750 = vpack.c.b16 %v738, %v737
    %v751 = vpack.c.b16 %v740, %v739
    %v752 = vpack.c.b16 %v742, %v741
    %v753 = vpack.c.b16 %v744, %v743
    %v754 = vpack.c.b16 %v746, %v745
    %763 = vmatprep.subr.bf16.mxu0 0
    %764 = vmatpush1.bf16.msra.mxu0 %v747
    %765 = vmatprep.subr.bf16.mxu0 0
    %766 = vmatpush1.bf16.msra.mxu0 %v748
    %767 = vmatprep.subr.bf16.mxu0 0
    %768 = vmatpush1.bf16.msra.mxu0 %v749
    %769 = vmatprep.subr.bf16.mxu0 0
    %770 = vmatpush1.bf16.msra.mxu0 %v750
    %771 = vmatprep.subr.bf16.mxu0 0
    %772 = vmatpush1.bf16.msra.mxu0 %v751
    %773 = vmatprep.subr.bf16.mxu0 0
    %774 = vmatpush1.bf16.msra.mxu0 %v752
    %775 = vmatprep.subr.bf16.mxu0 0
    %776 = vmatpush1.bf16.msra.mxu0 %v753
    %777 = vmatprep.subr.bf16.mxu0 0
    %778 = vmatpush1.bf16.msra.mxu0 %v754
    %779 = vmatprep.subr.bf16.mxu0 0
    %780 = vmatpush1.bf16.msra.mxu0 0
    %781 = vmatprep.subr.bf16.mxu0 0
    %782 = vmatpush1.bf16.msra.mxu0 0
    %783 = vmatprep.subr.bf16.mxu0 0
    %784 = vmatpush1.bf16.msra.mxu0 0
    %785 = vmatprep.subr.bf16.mxu0 0
    %786 = vmatpush1.bf16.msra.mxu0 0
    %787 = vmatprep.subr.bf16.mxu0 0
    %788 = vmatpush1.bf16.msra.mxu0 0
    %789 = vmatprep.subr.bf16.mxu0 0
    %790 = vmatpush1.bf16.msra.mxu0 0
    %791 = vmatprep.subr.bf16.mxu0 0
    %792 = vmatpush1.bf16.msra.mxu0 0
    %793 = vmatprep.subr.bf16.mxu0 0
    %794 = vmatpush1.bf16.msra.mxu0 0
    %795 = vmatprep.mubr.bf16.mxu0 0
    %796 = vmatmul.mubr.bf16.gmra.mrb[0].mxu0 %v226
    %v797 = vpop.f32.mrb[0].mxu0
    %v798 = vadd.f32 %v713, %v797
    %v799 = vpop.f32.mrb[0].mxu0
    %v800 = vpop.f32.mrb[0].mxu0
    %v801 = vadd.f32 %v713, %v800
    %v802 = vpop.f32.mrb[0].mxu0
    %803 = vmatprep.mubr.bf16.mxu0 0
    %804 = vmatmul.mubr.bf16.gmra.mrb[0].mxu0 %v227
    %v805 = vpop.f32.mrb[0].mxu0
    %v806 = vadd.f32 %v713, %v805
    %v807 = vpop.f32.mrb[0].mxu0
    %v808 = vpop.f32.mrb[0].mxu0
    %v809 = vadd.f32 %v713, %v808
    %v810 = vpop.f32.mrb[0].mxu0
    %811 = vmatprep.mubr.bf16.mxu0 0
    %812 = vmatmul.mubr.bf16.gmra.mrb[0].mxu0 %v228
    %v813 = vpop.f32.mrb[0].mxu0
    %v814 = vadd.f32 %v713, %v813
    %v815 = vpop.f32.mrb[0].mxu0
    %v816 = vpop.f32.mrb[0].mxu0
    %v817 = vadd.f32 %v713, %v816
    %v818 = vpop.f32.mrb[0].mxu0
    %819 = vmatprep.mubr.bf16.mxu0 0
    %820 = vmatmul.mubr.bf16.gmra.mrb[0].mxu0 %v229
    %v821 = vpop.f32.mrb[0].mxu0
    %v822 = vadd.f32 %v713, %v821
    %v823 = vpop.f32.mrb[0].mxu0
    %v824 = vpop.f32.mrb[0].mxu0
    %v825 = vadd.f32 %v713, %v824
    %v826 = vpop.f32.mrb[0].mxu0
    %827 = vmatprep.mubr.bf16.mxu0 0
    %828 = vmatmul.mubr.bf16.gmra.mrb[0].mxu0 %v230
    %v829 = vpop.f32.mrb[0].mxu0
    %v830 = vadd.f32 %v713, %v829
    %v831 = vpop.f32.mrb[0].mxu0
    %v832 = vpop.f32.mrb[0].mxu0
    %v833 = vadd.f32 %v713, %v832
    %v834 = vpop.f32.mrb[0].mxu0
    %835 = vmatprep.mubr.bf16.mxu0 0
    %836 = vmatmul.mubr.bf16.gmra.mrb[0].mxu0 %v231
    %v837 = vpop.f32.mrb[0].mxu0
    %v838 = vadd.f32 %v713, %v837
    %v839 = vpop.f32.mrb[0].mxu0
    %v840 = vpop.f32.mrb[0].mxu0
    %v841 = vadd.f32 %v713, %v840
    %v842 = vpop.f32.mrb[0].mxu0
    %843 = vmatprep.mubr.bf16.mxu0 0
    %844 = vmatmul.mubr.bf16.gmra.mrb[0].mxu0 %v232
    %v845 = vpop.f32.mrb[0].mxu0
    %v846 = vadd.f32 %v713, %v845
    %v847 = vpop.f32.mrb[0].mxu0
    %v848 = vpop.f32.mrb[0].mxu0
    %v849 = vadd.f32 %v713, %v848
    %v850 = vpop.f32.mrb[0].mxu0
    %851 = vmatprep.mubr.bf16.mxu0 0
    %852 = vmatmul.mubr.bf16.gmra.mrb[0].mxu0 %v233
    %v853 = vpop.f32.mrb[0].mxu0
    %v854 = vadd.f32 %v713, %v853
    %v855 = vpop.f32.mrb[0].mxu0
    %v856 = vpop.f32.mrb[0].mxu0
    %v857 = vadd.f32 %v713, %v856
    %v858 = vpop.f32.mrb[0].mxu0
    %859 = vmatprep.mubr.bf16.mxu0 0
    %860 = vmatmul.mubr.bf16.gmra.mrb[0].mxu0 %v234
    %v861 = vpop.f32.mrb[0].mxu0
    %v862 = vadd.f32 %v713, %v861
    %v863 = vpop.f32.mrb[0].mxu0
    %v864 = vpop.f32.mrb[0].mxu0
    %v865 = vadd.f32 %v713, %v864
    %v866 = vpop.f32.mrb[0].mxu0
    %867 = vmatprep.mubr.bf16.mxu0 0
    %868 = vmatmul.mubr.bf16.gmra.mrb[0].mxu0 %v235
    %v869 = vpop.f32.mrb[0].mxu0
    %v870 = vadd.f32 %v713, %v869
    %v871 = vpop.f32.mrb[0].mxu0
    %v872 = vpop.f32.mrb[0].mxu0
    %v873 = vadd.f32 %v713, %v872
    %v874 = vpop.f32.mrb[0].mxu0
    %875 = vmatprep.mubr.bf16.mxu0 0
    %876 = vmatmul.mubr.bf16.gmra.mrb[0].mxu0 %v236
    %v877 = vpop.f32.mrb[0].mxu0
    %v878 = vadd.f32 %v713, %v877
    %v879 = vpop.f32.mrb[0].mxu0
    %v880 = vpop.f32.mrb[0].mxu0
    %v881 = vadd.f32 %v713, %v880
    %v882 = vpop.f32.mrb[0].mxu0
    %883 = vmatprep.mubr.bf16.mxu0 0
    %884 = vmatmul.mubr.bf16.gmra.mrb[0].mxu0 %v237
    %v885 = vpop.f32.mrb[0].mxu0
    %v886 = vadd.f32 %v713, %v885
    %v887 = vpop.f32.mrb[0].mxu0
    %v888 = vpop.f32.mrb[0].mxu0
    %v889 = vadd.f32 %v713, %v888
    %v890 = vpop.f32.mrb[0].mxu0
    %891 = vmatprep.mubr.bf16.mxu0 0
    %892 = vmatmul.mubr.bf16.gmra.mrb[0].mxu0 %v238
    %v893 = vpop.f32.mrb[0].mxu0
    %v894 = vadd.f32 %v713, %v893
    %v895 = vpop.f32.mrb[0].mxu0
    %v896 = vpop.f32.mrb[0].mxu0
    %v897 = vadd.f32 %v713, %v896
    %v898 = vpop.f32.mrb[0].mxu0
    %899 = vmatprep.mubr.bf16.mxu0 0
    %900 = vmatmul.mubr.bf16.gmra.mrb[0].mxu0 %v239
    %v901 = vpop.f32.mrb[0].mxu0
    %v902 = vadd.f32 %v713, %v901
    %v903 = vpop.f32.mrb[0].mxu0
    %v904 = vpop.f32.mrb[0].mxu0
    %v905 = vadd.f32 %v713, %v904
    %v906 = vpop.f32.mrb[0].mxu0
    %907 = vmatprep.mubr.bf16.mxu0 0
    %908 = vmatmul.mubr.bf16.gmra.mrb[0].mxu0 %v240
    %v909 = vpop.f32.mrb[0].mxu0
    %v910 = vadd.f32 %v713, %v909
    %v911 = vpop.f32.mrb[0].mxu0
    %v912 = vpop.f32.mrb[0].mxu0
    %v913 = vadd.f32 %v713, %v912
    %v914 = vpop.f32.mrb[0].mxu0
    %915 = vmatprep.mubr.bf16.mxu0 0
    %916 = vmatmul.mubr.bf16.gmra.mrb[0].mxu0 %v241
    %v917 = vpop.f32.mrb[0].mxu0
    %v918 = vadd.f32 %v713, %v917
    %v919 = vpop.f32.mrb[0].mxu0
    %v920 = vpop.f32.mrb[0].mxu0
    %v921 = vadd.f32 %v713, %v920
    %v922 = vpop.f32.mrb[0].mxu0
    %923 = vdwg.mxu0
    %v924 = vpack.c.bf16 %v344, %v341
    %v925 = vpack.c.bf16 %v352, %v349
    %v926 = vpack.c.bf16 %v360, %v357
    %v927 = vpack.c.bf16 %v368, %v365
    %v928 = vpack.c.bf16 %v376, %v373
    %v929 = vpack.c.bf16 %v384, %v381
    %v930 = vpack.c.bf16 %v392, %v389
    %v931 = vpack.c.bf16 %v400, %v397
    %v932 = vpack.c.bf16 %v408, %v405
    %v933 = vpack.c.bf16 %v416, %v413
    %v934 = vpack.c.bf16 %v424, %v421
    %v935 = vpack.c.bf16 %v432, %v429
    %v936 = vpack.c.bf16 %v440, %v437
    %v937 = vpack.c.bf16 %v448, %v445
    %v938 = vpack.c.bf16 %v456, %v453
    %v939 = vpack.c.bf16 %v464, %v461
    %v956 = vunpack.c.l.b16 %v924
    %v957 = vunpack.c.h.b16 %v924
    %v958 = vunpack.c.l.b16 %v925
    %v959 = vunpack.c.h.b16 %v925
    %v960 = vunpack.c.l.b16 %v926
    %v961 = vunpack.c.h.b16 %v926
    %v962 = vunpack.c.l.b16 %v927
    %v963 = vunpack.c.h.b16 %v927
    %v964 = vunpack.c.l.b16 %v928
    %v965 = vunpack.c.h.b16 %v928
    %v966 = vunpack.c.l.b16 %v929
    %v967 = vunpack.c.h.b16 %v929
    %v968 = vunpack.c.l.b16 %v930
    %v969 = vunpack.c.h.b16 %v930
    %v970 = vunpack.c.l.b16 %v931
    %v971 = vunpack.c.h.b16 %v931
    %v972 = vunpack.c.l.b16 %v932
    %v973 = vunpack.c.h.b16 %v932
    %v974 = vunpack.c.l.b16 %v933
    %v975 = vunpack.c.h.b16 %v933
    %v976 = vunpack.c.l.b16 %v934
    %v977 = vunpack.c.h.b16 %v934
    %v978 = vunpack.c.l.b16 %v935
    %v979 = vunpack.c.h.b16 %v935
    %v980 = vunpack.c.l.b16 %v936
    %v981 = vunpack.c.h.b16 %v936
    %v982 = vunpack.c.l.b16 %v937
    %v983 = vunpack.c.h.b16 %v937
    %v984 = vunpack.c.l.b16 %v938
    %v985 = vunpack.c.h.b16 %v938
    %v986 = vunpack.c.l.b16 %v939
    %v987 = vunpack.c.h.b16 %v939
    %v988 = vpack.c.b16 %v956, %v956
    %v989 = vpack.c.b16 %v957, %v957
    %v990 = vpack.c.b16 %v958, %v958
    %v991 = vpack.c.b16 %v959, %v959
    %v992 = vpack.c.b16 %v960, %v960
    %v993 = vpack.c.b16 %v961, %v961
    %v994 = vpack.c.b16 %v962, %v962
    %v995 = vpack.c.b16 %v963, %v963
    %v996 = vpack.c.b16 %v964, %v964
    %v997 = vpack.c.b16 %v965, %v965
    %v998 = vpack.c.b16 %v966, %v966
    %v999 = vpack.c.b16 %v967, %v967
    %v1000 = vpack.c.b16 %v968, %v968
    %v1001 = vpack.c.b16 %v969, %v969
    %v1002 = vpack.c.b16 %v970, %v970
    %v1003 = vpack.c.b16 %v971, %v971
    %v1004 = vpack.c.b16 %v972, %v972
    %v1005 = vpack.c.b16 %v973, %v973
    %v1006 = vpack.c.b16 %v974, %v974
    %v1007 = vpack.c.b16 %v975, %v975
    %v1008 = vpack.c.b16 %v976, %v976
    %v1009 = vpack.c.b16 %v977, %v977
    %v1010 = vpack.c.b16 %v978, %v978
    %v1011 = vpack.c.b16 %v979, %v979
    %v1012 = vpack.c.b16 %v980, %v980
    %v1013 = vpack.c.b16 %v981, %v981
    %v1014 = vpack.c.b16 %v982, %v982
    %v1015 = vpack.c.b16 %v983, %v983
    %v1016 = vpack.c.b16 %v984, %v984
    %v1017 = vpack.c.b16 %v985, %v985
    %v1018 = vpack.c.b16 %v986, %v986
    %v1019 = vpack.c.b16 %v987, %v987
    %1052 = vst [vmem:[#allocation13] sm:$0xf] %v988
    %1053 = vst [vmem:[#allocation13 + $0x4] sm:$0xf] %v989
    %1054 = vst [vmem:[#allocation13 + $0x8] sm:$0xf] %v990
    %1055 = vst [vmem:[#allocation13 + $0xc] sm:$0xf] %v991
    %1056 = vst [vmem:[#allocation13 + $0x10] sm:$0xf] %v992
    %1057 = vst [vmem:[#allocation13 + $0x14] sm:$0xf] %v993
    %1058 = vst [vmem:[#allocation13 + $0x18] sm:$0xf] %v994
    %1059 = vst [vmem:[#allocation13 + $0x1c] sm:$0xf] %v995
    %1060 = vst [vmem:[#allocation13 + $0x20] sm:$0xf] %v996
    %1061 = vst [vmem:[#allocation13 + $0x24] sm:$0xf] %v997
    %1062 = vst [vmem:[#allocation13 + $0x28] sm:$0xf] %v998
    %1063 = vst [vmem:[#allocation13 + $0x2c] sm:$0xf] %v999
    %1064 = vst [vmem:[#allocation13 + $0x30] sm:$0xf] %v1000
    %1065 = vst [vmem:[#allocation13 + $0x34] sm:$0xf] %v1001
    %1066 = vst [vmem:[#allocation13 + $0x38] sm:$0xf] %v1002
    %1067 = vst [vmem:[#allocation13 + $0x3c] sm:$0xf] %v1003
    %1068 = vst [vmem:[#allocation13 + $0x40] sm:$0xf] %v1004
    %1069 = vst [vmem:[#allocation13 + $0x44] sm:$0xf] %v1005
    %1070 = vst [vmem:[#allocation13 + $0x48] sm:$0xf] %v1006
    %1071 = vst [vmem:[#allocation13 + $0x4c] sm:$0xf] %v1007
    %1072 = vst [vmem:[#allocation13 + $0x50] sm:$0xf] %v1008
    %1073 = vst [vmem:[#allocation13 + $0x54] sm:$0xf] %v1009
    %1074 = vst [vmem:[#allocation13 + $0x58] sm:$0xf] %v1010
    %1075 = vst [vmem:[#allocation13 + $0x5c] sm:$0xf] %v1011
    %1076 = vst [vmem:[#allocation13 + $0x60] sm:$0xf] %v1012
    %1077 = vst [vmem:[#allocation13 + $0x64] sm:$0xf] %v1013
    %1078 = vst [vmem:[#allocation13 + $0x68] sm:$0xf] %v1014
    %1079 = vst [vmem:[#allocation13 + $0x6c] sm:$0xf] %v1015
    %1080 = vst [vmem:[#allocation13 + $0x70] sm:$0xf] %v1016
    %1081 = vst [vmem:[#allocation13 + $0x74] sm:$0xf] %v1017
    %1082 = vst [vmem:[#allocation13 + $0x78] sm:$0xf] %v1018
    %1083 = vst [vmem:[#allocation13 + $0x7c] sm:$0xf] %v1019
    %v1084 = vpack.c.bf16 %v569, %v566
    %v1085 = vpack.c.bf16 %v577, %v574
    %v1086 = vpack.c.bf16 %v585, %v582
    %v1087 = vpack.c.bf16 %v593, %v590
    %v1088 = vpack.c.bf16 %v601, %v598
    %v1089 = vpack.c.bf16 %v609, %v606
    %v1090 = vpack.c.bf16 %v617, %v614
    %v1091 = vpack.c.bf16 %v625, %v622
    %v1092 = vpack.c.bf16 %v633, %v630
    %v1093 = vpack.c.bf16 %v641, %v638
    %v1094 = vpack.c.bf16 %v649, %v646
    %v1095 = vpack.c.bf16 %v657, %v654
    %v1096 = vpack.c.bf16 %v665, %v662
    %v1097 = vpack.c.bf16 %v673, %v670
    %v1098 = vpack.c.bf16 %v681, %v678
    %v1099 = vpack.c.bf16 %v689, %v686
    %v1116 = vunpack.c.l.b16 %v1084
    %v1117 = vunpack.c.h.b16 %v1084
    %v1118 = vunpack.c.l.b16 %v1085
    %v1119 = vunpack.c.h.b16 %v1085
    %v1120 = vunpack.c.l.b16 %v1086
    %v1121 = vunpack.c.h.b16 %v1086
    %v1122 = vunpack.c.l.b16 %v1087
    %v1123 = vunpack.c.h.b16 %v1087
    %v1124 = vunpack.c.l.b16 %v1088
    %v1125 = vunpack.c.h.b16 %v1088
    %v1126 = vunpack.c.l.b16 %v1089
    %v1127 = vunpack.c.h.b16 %v1089
    %v1128 = vunpack.c.l.b16 %v1090
    %v1129 = vunpack.c.h.b16 %v1090
    %v1130 = vunpack.c.l.b16 %v1091
    %v1131 = vunpack.c.h.b16 %v1091
    %v1132 = vunpack.c.l.b16 %v1092
    %v1133 = vunpack.c.h.b16 %v1092
    %v1134 = vunpack.c.l.b16 %v1093
    %v1135 = vunpack.c.h.b16 %v1093
    %v1136 = vunpack.c.l.b16 %v1094
    %v1137 = vunpack.c.h.b16 %v1094
    %v1138 = vunpack.c.l.b16 %v1095
    %v1139 = vunpack.c.h.b16 %v1095
    %v1140 = vunpack.c.l.b16 %v1096
    %v1141 = vunpack.c.h.b16 %v1096
    %v1142 = vunpack.c.l.b16 %v1097
    %v1143 = vunpack.c.h.b16 %v1097
    %v1144 = vunpack.c.l.b16 %v1098
    %v1145 = vunpack.c.h.b16 %v1098
    %v1146 = vunpack.c.l.b16 %v1099
    %v1147 = vunpack.c.h.b16 %v1099
    %v1148 = vpack.c.b16 %v1116, %v1116
    %v1149 = vpack.c.b16 %v1117, %v1117
    %v1150 = vpack.c.b16 %v1118, %v1118
    %v1151 = vpack.c.b16 %v1119, %v1119
    %v1152 = vpack.c.b16 %v1120, %v1120
    %v1153 = vpack.c.b16 %v1121, %v1121
    %v1154 = vpack.c.b16 %v1122, %v1122
    %v1155 = vpack.c.b16 %v1123, %v1123
    %v1156 = vpack.c.b16 %v1124, %v1124
    %v1157 = vpack.c.b16 %v1125, %v1125
    %v1158 = vpack.c.b16 %v1126, %v1126
    %v1159 = vpack.c.b16 %v1127, %v1127
    %v1160 = vpack.c.b16 %v1128, %v1128
    %v1161 = vpack.c.b16 %v1129, %v1129
    %v1162 = vpack.c.b16 %v1130, %v1130
    %v1163 = vpack.c.b16 %v1131, %v1131
    %v1164 = vpack.c.b16 %v1132, %v1132
    %v1165 = vpack.c.b16 %v1133, %v1133
    %v1166 = vpack.c.b16 %v1134, %v1134
    %v1167 = vpack.c.b16 %v1135, %v1135
    %v1168 = vpack.c.b16 %v1136, %v1136
    %v1169 = vpack.c.b16 %v1137, %v1137
    %v1170 = vpack.c.b16 %v1138, %v1138
    %v1171 = vpack.c.b16 %v1139, %v1139
    %v1172 = vpack.c.b16 %v1140, %v1140
    %v1173 = vpack.c.b16 %v1141, %v1141
    %v1174 = vpack.c.b16 %v1142, %v1142
    %v1175 = vpack.c.b16 %v1143, %v1143
    %v1176 = vpack.c.b16 %v1144, %v1144
    %v1177 = vpack.c.b16 %v1145, %v1145
    %v1178 = vpack.c.b16 %v1146, %v1146
    %v1179 = vpack.c.b16 %v1147, %v1147
    %1212 = vst [vmem:[#allocation14] sm:$0xf] %v1148
    %1213 = vst [vmem:[#allocation14 + $0x4] sm:$0xf] %v1149
    %1214 = vst [vmem:[#allocation14 + $0x8] sm:$0xf] %v1150
    %1215 = vst [vmem:[#allocation14 + $0xc] sm:$0xf] %v1151
    %1216 = vst [vmem:[#allocation14 + $0x10] sm:$0xf] %v1152
    %1217 = vst [vmem:[#allocation14 + $0x14] sm:$0xf] %v1153
    %1218 = vst [vmem:[#allocation14 + $0x18] sm:$0xf] %v1154
    %1219 = vst [vmem:[#allocation14 + $0x1c] sm:$0xf] %v1155
    %1220 = vst [vmem:[#allocation14 + $0x20] sm:$0xf] %v1156
    %1221 = vst [vmem:[#allocation14 + $0x24] sm:$0xf] %v1157
    %1222 = vst [vmem:[#allocation14 + $0x28] sm:$0xf] %v1158
    %1223 = vst [vmem:[#allocation14 + $0x2c] sm:$0xf] %v1159
    %1224 = vst [vmem:[#allocation14 + $0x30] sm:$0xf] %v1160
    %1225 = vst [vmem:[#allocation14 + $0x34] sm:$0xf] %v1161
    %1226 = vst [vmem:[#allocation14 + $0x38] sm:$0xf] %v1162
    %1227 = vst [vmem:[#allocation14 + $0x3c] sm:$0xf] %v1163
    %1228 = vst [vmem:[#allocation14 + $0x40] sm:$0xf] %v1164
    %1229 = vst [vmem:[#allocation14 + $0x44] sm:$0xf] %v1165
    %1230 = vst [vmem:[#allocation14 + $0x48] sm:$0xf] %v1166
    %1231 = vst [vmem:[#allocation14 + $0x4c] sm:$0xf] %v1167
    %1232 = vst [vmem:[#allocation14 + $0x50] sm:$0xf] %v1168
    %1233 = vst [vmem:[#allocation14 + $0x54] sm:$0xf] %v1169
    %1234 = vst [vmem:[#allocation14 + $0x58] sm:$0xf] %v1170
    %1235 = vst [vmem:[#allocation14 + $0x5c] sm:$0xf] %v1171
    %1236 = vst [vmem:[#allocation14 + $0x60] sm:$0xf] %v1172
    %1237 = vst [vmem:[#allocation14 + $0x64] sm:$0xf] %v1173
    %1238 = vst [vmem:[#allocation14 + $0x68] sm:$0xf] %v1174
    %1239 = vst [vmem:[#allocation14 + $0x6c] sm:$0xf] %v1175
    %1240 = vst [vmem:[#allocation14 + $0x70] sm:$0xf] %v1176
    %1241 = vst [vmem:[#allocation14 + $0x74] sm:$0xf] %v1177
    %1242 = vst [vmem:[#allocation14 + $0x78] sm:$0xf] %v1178
    %1243 = vst [vmem:[#allocation14 + $0x7c] sm:$0xf] %v1179
    %v1244 = vpack.c.bf16 %v801, %v798
    %v1245 = vpack.c.bf16 %v809, %v806
    %v1246 = vpack.c.bf16 %v817, %v814
    %v1247 = vpack.c.bf16 %v825, %v822
    %v1248 = vpack.c.bf16 %v833, %v830
    %v1249 = vpack.c.bf16 %v841, %v838
    %v1250 = vpack.c.bf16 %v849, %v846
    %v1251 = vpack.c.bf16 %v857, %v854
    %v1252 = vpack.c.bf16 %v865, %v862
    %v1253 = vpack.c.bf16 %v873, %v870
    %v1254 = vpack.c.bf16 %v881, %v878
    %v1255 = vpack.c.bf16 %v889, %v886
    %v1256 = vpack.c.bf16 %v897, %v894
    %v1257 = vpack.c.bf16 %v905, %v902
    %v1258 = vpack.c.bf16 %v913, %v910
    %v1259 = vpack.c.bf16 %v921, %v918
    %v1276 = vunpack.c.l.b16 %v1244
    %v1277 = vunpack.c.h.b16 %v1244
    %v1278 = vunpack.c.l.b16 %v1245
    %v1279 = vunpack.c.h.b16 %v1245
    %v1280 = vunpack.c.l.b16 %v1246
    %v1281 = vunpack.c.h.b16 %v1246
    %v1282 = vunpack.c.l.b16 %v1247
    %v1283 = vunpack.c.h.b16 %v1247
    %v1284 = vunpack.c.l.b16 %v1248
    %v1285 = vunpack.c.h.b16 %v1248
    %v1286 = vunpack.c.l.b16 %v1249
    %v1287 = vunpack.c.h.b16 %v1249
    %v1288 = vunpack.c.l.b16 %v1250
    %v1289 = vunpack.c.h.b16 %v1250
    %v1290 = vunpack.c.l.b16 %v1251
    %v1291 = vunpack.c.h.b16 %v1251
    %v1292 = vunpack.c.l.b16 %v1252
    %v1293 = vunpack.c.h.b16 %v1252
    %v1294 = vunpack.c.l.b16 %v1253
    %v1295 = vunpack.c.h.b16 %v1253
    %v1296 = vunpack.c.l.b16 %v1254
    %v1297 = vunpack.c.h.b16 %v1254
    %v1298 = vunpack.c.l.b16 %v1255
    %v1299 = vunpack.c.h.b16 %v1255
    %v1300 = vunpack.c.l.b16 %v1256
    %v1301 = vunpack.c.h.b16 %v1256
    %v1302 = vunpack.c.l.b16 %v1257
    %v1303 = vunpack.c.h.b16 %v1257
    %v1304 = vunpack.c.l.b16 %v1258
    %v1305 = vunpack.c.h.b16 %v1258
    %v1306 = vunpack.c.l.b16 %v1259
    %v1307 = vunpack.c.h.b16 %v1259
    %v1308 = vpack.c.b16 %v1276, %v1276
    %v1309 = vpack.c.b16 %v1277, %v1277
    %v1310 = vpack.c.b16 %v1278, %v1278
    %v1311 = vpack.c.b16 %v1279, %v1279
    %v1312 = vpack.c.b16 %v1280, %v1280
    %v1313 = vpack.c.b16 %v1281, %v1281
    %v1314 = vpack.c.b16 %v1282, %v1282
    %v1315 = vpack.c.b16 %v1283, %v1283
    %v1316 = vpack.c.b16 %v1284, %v1284
    %v1317 = vpack.c.b16 %v1285, %v1285
    %v1318 = vpack.c.b16 %v1286, %v1286
    %v1319 = vpack.c.b16 %v1287, %v1287
    %v1320 = vpack.c.b16 %v1288, %v1288
    %v1321 = vpack.c.b16 %v1289, %v1289
    %v1322 = vpack.c.b16 %v1290, %v1290
    %v1323 = vpack.c.b16 %v1291, %v1291
    %v1324 = vpack.c.b16 %v1292, %v1292
    %v1325 = vpack.c.b16 %v1293, %v1293
    %v1326 = vpack.c.b16 %v1294, %v1294
    %v1327 = vpack.c.b16 %v1295, %v1295
    %v1328 = vpack.c.b16 %v1296, %v1296
    %v1329 = vpack.c.b16 %v1297, %v1297
    %v1330 = vpack.c.b16 %v1298, %v1298
    %v1331 = vpack.c.b16 %v1299, %v1299
    %v1332 = vpack.c.b16 %v1300, %v1300
    %v1333 = vpack.c.b16 %v1301, %v1301
    %v1334 = vpack.c.b16 %v1302, %v1302
    %v1335 = vpack.c.b16 %v1303, %v1303
    %v1336 = vpack.c.b16 %v1304, %v1304
    %v1337 = vpack.c.b16 %v1305, %v1305
    %v1338 = vpack.c.b16 %v1306, %v1306
    %v1339 = vpack.c.b16 %v1307, %v1307
    %1372 = vst [vmem:[#allocation16] sm:$0xf] %v1308
    %1373 = vst [vmem:[#allocation16 + $0x4] sm:$0xf] %v1309
    %1374 = vst [vmem:[#allocation16 + $0x8] sm:$0xf] %v1310
    %1375 = vst [vmem:[#allocation16 + $0xc] sm:$0xf] %v1311
    %1376 = vst [vmem:[#allocation16 + $0x10] sm:$0xf] %v1312
    %1377 = vst [vmem:[#allocation16 + $0x14] sm:$0xf] %v1313
    %1378 = vst [vmem:[#allocation16 + $0x18] sm:$0xf] %v1314
    %1379 = vst [vmem:[#allocation16 + $0x1c] sm:$0xf] %v1315
    %1380 = vst [vmem:[#allocation16 + $0x20] sm:$0xf] %v1316
    %1381 = vst [vmem:[#allocation16 + $0x24] sm:$0xf] %v1317
    %1382 = vst [vmem:[#allocation16 + $0x28] sm:$0xf] %v1318
    %1383 = vst [vmem:[#allocation16 + $0x2c] sm:$0xf] %v1319
    %1384 = vst [vmem:[#allocation16 + $0x30] sm:$0xf] %v1320
    %1385 = vst [vmem:[#allocation16 + $0x34] sm:$0xf] %v1321
    %1386 = vst [vmem:[#allocation16 + $0x38] sm:$0xf] %v1322
    %1387 = vst [vmem:[#allocation16 + $0x3c] sm:$0xf] %v1323
    %1388 = vst [vmem:[#allocation16 + $0x40] sm:$0xf] %v1324
    %1389 = vst [vmem:[#allocation16 + $0x44] sm:$0xf] %v1325
    %1390 = vst [vmem:[#allocation16 + $0x48] sm:$0xf] %v1326
    %1391 = vst [vmem:[#allocation16 + $0x4c] sm:$0xf] %v1327
    %1392 = vst [vmem:[#allocation16 + $0x50] sm:$0xf] %v1328
    %1393 = vst [vmem:[#allocation16 + $0x54] sm:$0xf] %v1329
    %1394 = vst [vmem:[#allocation16 + $0x58] sm:$0xf] %v1330
    %1395 = vst [vmem:[#allocation16 + $0x5c] sm:$0xf] %v1331
    %1396 = vst [vmem:[#allocation16 + $0x60] sm:$0xf] %v1332
    %1397 = vst [vmem:[#allocation16 + $0x64] sm:$0xf] %v1333
    %1398 = vst [vmem:[#allocation16 + $0x68] sm:$0xf] %v1334
    %1399 = vst [vmem:[#allocation16 + $0x6c] sm:$0xf] %v1335
    %1400 = vst [vmem:[#allocation16 + $0x70] sm:$0xf] %v1336
    %1401 = vst [vmem:[#allocation16 + $0x74] sm:$0xf] %v1337
    %1402 = vst [vmem:[#allocation16 + $0x78] sm:$0xf] %v1338
    %1403 = vst [vmem:[#allocation16 + $0x7c] sm:$0xf] %v1339
    // Predicated region
    $region50: #{tpu_custom_call.1} parent=1 // pred_check
      _
    $region51: #{tpu_custom_call.1} parent=1 // pred_check_branch
      %1405 = sbr.rel (0) target = $region53
    $region52: #{tpu_custom_call.1} parent=1 // pred_region
      %s1407 = ssub.s32 2048, 2048
      %1408 = vsyncadd [#allocation4], %s1407
      %s1409 = sshll.u32 [#allocation13], 4
      %s1410 = int_to_ptr.vmem [resolvable:$true] %s1409
      %1415 = dma.vmem_to_hbm [thread:$0]  %s1410, 2048, %s6, [#allocation4], 64, 64, 4
    $region53: #{tpu_custom_call.1} parent=1 // pred_fallthru
      _
    // Predicated region
    $region54: #{tpu_custom_call.1} parent=1 // pred_check
      _
    $region55: #{tpu_custom_call.1} parent=1 // pred_check_branch
      %1417 = sbr.rel (0) target = $region57
    $region56: #{tpu_custom_call.1} parent=1 // pred_region
      %s1419 = ssub.s32 2048, 2048
      %1420 = vsyncadd [#allocation15], %s1419
      %s1421 = sshll.u32 [#allocation14], 4
      %s1422 = int_to_ptr.vmem [resolvable:$true] %s1421
      %1427 = dma.vmem_to_hbm [thread:$0]  %s1422, 2048, %s7, [#allocation15], 64, 64, 4
    $region57: #{tpu_custom_call.1} parent=1 // pred_fallthru
      _
    // Predicated region
    $region58: #{tpu_custom_call.1} parent=1 // pred_check
      _
    $region59: #{tpu_custom_call.1} parent=1 // pred_check_branch
      %1429 = sbr.rel (0) target = $region61
    $region60: #{tpu_custom_call.1} parent=1 // pred_region
      %s1431 = ssub.s32 2048, 2048
      %1432 = vsyncadd [#allocation15], %s1431
      %s1433 = sshll.u32 [#allocation16], 4
      %s1434 = int_to_ptr.vmem [resolvable:$true] %s1433
      %1439 = dma.vmem_to_hbm [thread:$0]  %s1434, 2048, %s8, [#allocation15], 64, 64, 4
    $region61: #{tpu_custom_call.1} parent=1 // pred_fallthru
      _
    // Predicated region
    $region62: #{tpu_custom_call.1} parent=1 // pred_check
      _
    $region63: #{tpu_custom_call.1} parent=1 // pred_check_branch
      %1441 = sbr.rel (0) target = $region65
    $region64: #{tpu_custom_call.1} parent=1 // pred_region
      %1442 = dma.done [#allocation4], 2048
    $region65: #{tpu_custom_call.1} parent=1 // pred_fallthru
      _
    // Predicated region
    $region66: #{tpu_custom_call.1} parent=1 // pred_check
      _
    $region67: #{tpu_custom_call.1} parent=1 // pred_check_branch
      %1444 = sbr.rel (0) target = $region69
    $region68: #{tpu_custom_call.1} parent=1 // pred_region
      %1445 = dma.done [#allocation15], 2048
    $region69: #{tpu_custom_call.1} parent=1 // pred_fallthru
      _
    // Predicated region
    $region70: #{tpu_custom_call.1} parent=1 // pred_check
      _
    $region71: #{tpu_custom_call.1} parent=1 // pred_check_branch
      %1447 = sbr.rel (0) target = $region73
    $region72: #{tpu_custom_call.1} parent=1 // pred_region
      %1448 = dma.done [#allocation15], 2048
    $region73: #{tpu_custom_call.1} parent=1 // pred_fallthru
      _
    %1449 = vsyncpa [#allocation3], 1
    %1450 = vsyncpa [#allocation6], 1
    %1451 = vsyncpa [#allocation9], 1
    %1452 = vsyncpa [#allocation12], 1
    %1453 = vsyncpa [#allocation4], 1
    %1454 = vsyncpa [#allocation15], 1

</llo_original>
